<compile_context>
chip_gen: v7x
topology: tpu7x:2x2x1
jax: 0.10.0
libtpu: 0.0.40
codegen_flags: <defaults>
</compile_context>

<pallas_src>
import functools

import jax
import jax.numpy as jnp
from jax import lax
from jax.experimental import pallas as pl
from jax.experimental.pallas import tpu as pltpu


def _ceil_to(x, m):
    return ((x + m - 1) // m) * m


def _fold_bn(gamma, beta, bias, bn_eps=1e-5):
    # BatchNorm1d in eval mode with running_mean=0, running_var=1 (fresh init),
    # with the preceding linear bias folded in:
    #   BN(x @ W + b) = (x @ (W*scale)) + (b * scale + beta)
    scale = gamma / jnp.sqrt(1.0 + bn_eps)
    shift = beta + bias * scale
    return scale, shift


# -----------------------------------------------------------------------------
# Fused GNN kernel: grid axis = layer index.  Node state lives in node_out_ref
# (constant index map -> VMEM resident), virtual-node state in scratch.
# -----------------------------------------------------------------------------
def _gnn_fused_kernel(
        src_ref, dst_ref, batc_ref, batr_ref, eatt_ref, h0_ref, vn0_ref,
        ope_ref, btab_ref, W1_ref, t1_ref, W2_ref, t2_ref,
        vW1_ref, vt1_ref, vW2_ref, vt2_ref,
        node_out_ref, graph_out_ref,
        vn_st, batoh_st, pool_st, eoh_st, *inc_st,
        n_edge_blocks, edge_block, cache_incidence):
    f32, bf16, i32 = jnp.float32, jnp.bfloat16, jnp.int32
    l = pl.program_id(0)
    num_layer = pl.num_programs(0)
    n_pad, h_pad = node_out_ref.shape
    g_pad = vn_st.shape[0]
    e_pad, b_pad = eoh_st.shape

    # ---- one-time init (layer 0): states + one-hot matrices ------------------
    @pl.when(l == 0)
    def _init():
        node_out_ref[...] = h0_ref[...]
        vn_st[...] = jnp.broadcast_to(vn0_ref[...], (g_pad, h_pad))
        batoh_st[...] = (lax.broadcasted_iota(i32, (n_pad, g_pad), 1)
                         == batc_ref[...]).astype(bf16)              # (N, G)
        pool_st[...] = (lax.broadcasted_iota(i32, (g_pad, n_pad), 0)
                        == batr_ref[...]).astype(bf16)               # (G, N)
        eoh_st[...] = (lax.broadcasted_iota(i32, (e_pad, b_pad), 1)
                       == eatt_ref[...]).astype(bf16)                # (E, B)
        if cache_incidence:
            srcoh_st, dstohT_st = inc_st
            srcoh_st[...] = (lax.broadcasted_iota(i32, (e_pad, n_pad), 1)
                             == src_ref[...]).astype(bf16)           # (E, N)
            dstohT_st[...] = (lax.broadcasted_iota(i32, (n_pad, e_pad), 0)
                              == dst_ref[...]).astype(bf16)          # (N, E)

    h = node_out_ref[...]
    vn = vn_st[...]

    # h_in = h + virtualnode_embedding[batch]   (one-hot(batch) @ vn on MXU)
    h_in = h + jnp.dot(batoh_st[...], vn.astype(bf16),
                       preferred_element_type=f32)
    hb = h_in.astype(bf16)
    btab = btab_ref[0]                                               # (B, H) bf16

    # ---- GIN neighborhood aggregation ----------------------------------------
    #   msg = relu(h[src] + bond_emb[edge_attr]) ; agg = scatter_add(msg, dst)
    def gather_scatter(gat_blk, sca_blk, eoh_blk):
        e_blk = jnp.dot(eoh_blk, btab, preferred_element_type=f32)   # (EB, H)
        msg = jnp.maximum(
            jnp.dot(gat_blk, hb, preferred_element_type=f32) + e_blk, 0.0)
        return jnp.dot(sca_blk, msg.astype(bf16), preferred_element_type=f32)

    if cache_incidence:
        srcoh_st, dstohT_st = inc_st
        if n_edge_blocks == 1:
            agg = gather_scatter(srcoh_st[...], dstohT_st[...], eoh_st[...])
        else:
            def body(i, acc):
                off = pl.multiple_of(i * edge_block, edge_block)
                return acc + gather_scatter(
                    srcoh_st[pl.ds(off, edge_block), :],
                    dstohT_st[:, pl.ds(off, edge_block)],
                    eoh_st[pl.ds(off, edge_block), :])
            agg = lax.fori_loop(0, n_edge_blocks, body,
                                jnp.zeros((n_pad, h_pad), f32),
                                unroll=n_edge_blocks <= 4)
    else:
        # Fallback for graphs whose incidence cache exceeds the VMEM budget:
        # rebuild the 0/1 blocks per edge block (as before).
        # TODO(synk): index-based DMA gather/scatter for this path (see header).
        def rebuild_contrib(src_blk, dst_blk, eoh_blk):
            eb = src_blk.shape[0]
            gat = (lax.broadcasted_iota(i32, (eb, n_pad), 1)
                   == src_blk).astype(bf16)                          # (EB, N)
            sca = (lax.broadcasted_iota(i32, (n_pad, eb), 0)
                   == dst_blk).astype(bf16)                          # (N, EB)
            return gather_scatter(gat, sca, eoh_blk)

        if n_edge_blocks == 1:
            agg = rebuild_contrib(src_ref[...], dst_ref[...], eoh_st[...])
        else:
            def body(i, acc):
                off = pl.multiple_of(i * edge_block, edge_block)
                return acc + rebuild_contrib(
                    src_ref[pl.ds(off, edge_block), :],
                    dst_ref[:, pl.ds(off, edge_block)],
                    eoh_st[pl.ds(off, edge_block), :])
            agg = lax.fori_loop(0, n_edge_blocks, body,
                                jnp.zeros((n_pad, h_pad), f32),
                                unroll=n_edge_blocks <= 4)

    # ---- GIN MLP (BN scale pre-folded into bf16 weights), residual -----------
    z = ope_ref[0] * h_in + agg                                      # (1+eps)x + agg
    y1 = jnp.maximum(
        jnp.dot(z.astype(bf16), W1_ref[0], preferred_element_type=f32)
        + t1_ref[0], 0.0)
    pre = (jnp.dot(y1.astype(bf16), W2_ref[0], preferred_element_type=f32)
           + t2_ref[0])
    is_last = l == num_layer - 1
    # ReLU on every layer except the last; dropout = identity (eval); residual.
    h_new = jnp.where(is_last, pre, jnp.maximum(pre, 0.0)) + h_in
    node_out_ref[...] = h_new            # carried state; HBM writeback at the end

    # ---- virtual-node update (all layers except the last) --------------------
    @pl.when(jnp.logical_not(is_last))
    def _vn_update():
        vn_tmp = jnp.dot(pool_st[...], hb, preferred_element_type=f32) + vn
        u = jnp.maximum(
            jnp.dot(vn_tmp.astype(bf16), vW1_ref[0],
                    preferred_element_type=f32) + vt1_ref[0], 0.0)
        u = jnp.maximum(
            jnp.dot(u.astype(bf16), vW2_ref[0],
                    preferred_element_type=f32) + vt2_ref[0], 0.0)
        vn_st[...] = vn + u                                          # residual

    # ---- readout (global max pool) at the last layer --------------------------
    # Per-graph masked max: no (G, N, H) broadcast temporary (review #3).
    @pl.when(is_last)
    def _readout():
        neg = jnp.float32(-3.0e38)

        def gbody(g, acc):
            mask = batc_ref[...] == g                                # (N, 1)
            gmax = jnp.max(jnp.where(mask, h_new, neg),
                           axis=0, keepdims=True)                    # (1, H)
            rowsel = lax.broadcasted_iota(i32, (g_pad, 1), 0) == g
            return jnp.where(rowsel, gmax, acc)

        graph_out_ref[...] = lax.fori_loop(
            0, g_pad, gbody, jnp.full((g_pad, h_pad), neg, f32))


# -----------------------------------------------------------------------------
# Wrapper: pad/pack parameters, fold BN into weights/shifts, call fused kernel.
# -----------------------------------------------------------------------------
def gnn_forward(params, x_ids, edge_attr_ids, edge_index, batch, num_graphs):
    N = int(x_ids.shape[0])
    E = int(edge_index.shape[1])
    L = len(params['layers'])
    H = int(params['emb_atom'].shape[1])
    H2 = 2 * H
    B = int(params['layers'][0]['emb_bond'].shape[0])

    H_pad = _ceil_to(H, 128)
    H2_pad = _ceil_to(H2, 128)
    B_pad = _ceil_to(B, 128)
    N_pad = max(_ceil_to(N, 8), 8)
    G_pad = max(_ceil_to(num_graphs, 8), 8)

    # per-generation knobs: 128 MiB VMEM (v5e/v6e) vs 64 MiB (v7x)
    try:
        vmem_cap = int(pltpu.get_tpu_info().vmem_capacity_bytes)
    except Exception:  # conservative fallback
        vmem_cap = 64 << 20
    if vmem_cap >= (100 << 20):
        vmem_limit, edge_block_cfg, cache_budget = 100 << 20, 1024, 48 << 20
    else:
        vmem_limit = max(min(48 << 20, (vmem_cap * 3) // 4), 8 << 20)
        edge_block_cfg, cache_budget = 512, min(16 << 20, vmem_cap // 4)

    if E <= edge_block_cfg:
        E_pad = max(_ceil_to(E, 8), 8)
        eb = E_pad
    else:
        E_pad = _ceil_to(E, edge_block_cfg)
        eb = edge_block_cfg
    n_eb = E_pad // eb

    # cache incidence matrices iff 2 * (E_pad x N_pad) bf16 fits the budget
    cache_incidence = (2 * E_pad * N_pad * 2) <= cache_budget

    f32, bf16, i32 = jnp.float32, jnp.bfloat16, jnp.int32

    def pad2(a, r, c):
        return jnp.pad(a, ((0, r - a.shape[0]), (0, c - a.shape[1])))

    # node / edge / batch tensors ----------------------------------------------
    h0 = pad2(params['emb_atom'][x_ids].astype(f32), N_pad, H_pad)   # AtomEncoder
    vn0 = pad2(params['vn_emb'].astype(f32), 1, H_pad)               # vn emb (zeros)

    src = jnp.pad(edge_index[0].astype(i32), (0, E_pad - E), constant_values=-1)
    dst = jnp.pad(edge_index[1].astype(i32), (0, E_pad - E), constant_values=-1)
    eat = jnp.pad(edge_attr_ids.astype(i32), (0, E_pad - E), constant_values=-1)
    bat = jnp.pad(batch.astype(i32), (0, N_pad - N), constant_values=-1)
    src_col = src.reshape(E_pad, 1)
    dst_row = dst.reshape(1, E_pad)
    eat_col = eat.reshape(E_pad, 1)
    bat_col = bat.reshape(N_pad, 1)
    bat_row = bat.reshape(1, N_pad)

    # per-layer parameters (BN folded into weights+shifts, padded, stacked) -----
    btab, ope, W1, t1, W2, t2 = [], [], [], [], [], []
    for lp in params['layers']:
        btab.append(pad2(lp['emb_bond'].astype(f32), B_pad, H_pad))  # BondEncoder
        ope.append(jnp.full((1, H_pad), 1.0 + lp['eps'], f32))
        sc1, sh1 = _fold_bn(lp['g1'], lp['be1'], lp['b1'])
        sc2, sh2 = _fold_bn(lp['gL'], lp['beL'], lp['b2'])
        W1.append(pad2((lp['W1'] * sc1).astype(f32), H_pad, H2_pad))
        t1.append(pad2(sh1, 1, H2_pad))
        W2.append(pad2((lp['W2'] * sc2).astype(f32), H2_pad, H_pad))
        t2.append(pad2(sh2, 1, H_pad))
    btab = jnp.stack(btab).astype(bf16)
    ope = jnp.stack(ope)
    W1 = jnp.stack(W1).astype(bf16); t1 = jnp.stack(t1)
    W2 = jnp.stack(W2).astype(bf16); t2 = jnp.stack(t2)

    Lv = max(L - 1, 1)
    vW1, vt1, vW2, vt2 = [], [], [], []
    for vp in params['vn_mlp']:
        sc1, sh1 = _fold_bn(vp['g1'], vp['be1'], vp['b1'])
        sc2, sh2 = _fold_bn(vp['g2'], vp['be2'], vp['b2'])
        vW1.append(pad2((vp['W1'] * sc1).astype(f32), H_pad, H2_pad))
        vt1.append(pad2(sh1, 1, H2_pad))
        vW2.append(pad2((vp['W2'] * sc2).astype(f32), H2_pad, H_pad))
        vt2.append(pad2(sh2, 1, H_pad))
    while len(vW1) < Lv:                                 # num_layer == 1 case
        vW1.append(jnp.zeros((H_pad, H2_pad), f32))
        vt1.append(jnp.zeros((1, H2_pad), f32))
        vW2.append(jnp.zeros((H2_pad, H_pad), f32))
        vt2.append(jnp.zeros((1, H_pad), f32))
    vW1 = jnp.stack(vW1).astype(bf16); vt1 = jnp.stack(vt1)
    vW2 = jnp.stack(vW2).astype(bf16); vt2 = jnp.stack(vt2)

    # block specs ---------------------------------------------------------------
    def fixed(shape):
        nd = len(shape)
        return pl.BlockSpec(shape, lambda l: (0,) * nd)

    def per_layer(shape):                    # leading dim indexed by layer axis
        nd = len(shape)
        return pl.BlockSpec((1,) + shape, lambda l: (l,) + (0,) * nd)

    def per_vn_layer(shape):                 # clamp: unused at the last layer
        nd = len(shape)
        return pl.BlockSpec(
            (1,) + shape, lambda l: (jnp.minimum(l, Lv - 1),) + (0,) * nd)

    in_specs = [
        fixed((E_pad, 1)), fixed((1, E_pad)),            # src, dst
        fixed((N_pad, 1)), fixed((1, N_pad)),            # batch (col, row)
        fixed((E_pad, 1)),                               # edge_attr ids
        fixed((N_pad, H_pad)), fixed((1, H_pad)),        # h0, vn0
        per_layer((1, H_pad)),                           # 1 + eps
        per_layer((B_pad, H_pad)),                       # bond table
        per_layer((H_pad, H2_pad)), per_layer((1, H2_pad)),   # W1 (scaled), t1
        per_layer((H2_pad, H_pad)), per_layer((1, H_pad)),    # W2 (scaled), t2
        per_vn_layer((H_pad, H2_pad)), per_vn_layer((1, H2_pad)),
        per_vn_layer((H2_pad, H_pad)), per_vn_layer((1, H_pad)),
    ]
    out_specs = [fixed((N_pad, H_pad)), fixed((G_pad, H_pad))]
    out_shape = (jax.ShapeDtypeStruct((N_pad, H_pad), f32),
                 jax.ShapeDtypeStruct((G_pad, H_pad), f32))

    scratch = [
        pltpu.VMEM((G_pad, H_pad), f32),       # virtual-node state
        pltpu.VMEM((N_pad, G_pad), bf16),      # one-hot(batch)    (N, G)
        pltpu.VMEM((G_pad, N_pad), bf16),      # pooling matrix    (G, N)
        pltpu.VMEM((E_pad, B_pad), bf16),      # edge-attr one-hot (E, B)
    ]
    if cache_incidence:
        scratch += [pltpu.VMEM((E_pad, N_pad), bf16),    # src gather one-hot
                    pltpu.VMEM((N_pad, E_pad), bf16)]    # dst scatter one-hot^T

    kernel = functools.partial(_gnn_fused_kernel,
                               n_edge_blocks=n_eb, edge_block=eb,
                               cache_incidence=cache_incidence)
    node_pad, graph_pad = pl.pallas_call(
        kernel,
        grid=(L,),
        in_specs=in_specs,
        out_specs=out_specs,
        out_shape=out_shape,
        scratch_shapes=scratch,
        compiler_params=pltpu.CompilerParams(
            dimension_semantics=("arbitrary",),    # layer axis carries state
            vmem_limit_bytes=vmem_limit),
    )(src_col, dst_row, bat_col, bat_row, eat_col, h0, vn0,
      ope, btab, W1, t1, W2, t2,
      vW1, vt1, vW2, vt2)

    return {'graph': graph_pad[:num_graphs, :H], 'node': node_pad[:N, :H]}


# -----------------------------------------------------------------------------
# Parameters (deterministic synthetic init)
# -----------------------------------------------------------------------------
def init_params(key, num_layer, H, num_atom_types=16, num_bond_types=8):
    H2 = 2 * H
    keys = iter(jax.random.split(key, 128))

    def nrm(shape, scale=0.1):
        return scale * jax.random.normal(next(keys), shape, dtype=jnp.float32)

    params = {
        'emb_atom': nrm((num_atom_types, H), 0.2),      # AtomEncoder (1 feature)
        'vn_emb': jnp.zeros((1, H), jnp.float32),       # virtual-node emb init 0
        'layers': [],
        'vn_mlp': [],
    }
    for _ in range(num_layer):
        params['layers'].append({
            'emb_bond': nrm((num_bond_types, H), 0.2),  # per-layer BondEncoder
            'eps': 0.1,                                 # GIN learnable eps
            'W1': nrm((H, H2)), 'b1': nrm((1, H2)),
            'g1': 1.0 + nrm((1, H2)), 'be1': nrm((1, H2)),   # BN inside GIN MLP
            'W2': nrm((H2, H)), 'b2': nrm((1, H)),
            'gL': 1.0 + nrm((1, H)), 'beL': nrm((1, H)),     # per-layer BN(H)
        })
    for _ in range(num_layer - 1):
        params['vn_mlp'].append({
            'W1': nrm((H, H2)), 'b1': nrm((1, H2)),
            'g1': 1.0 + nrm((1, H2)), 'be1': nrm((1, H2)),
            'W2': nrm((H2, H)), 'b2': nrm((1, H)),
            'g2': 1.0 + nrm((1, H)), 'be2': nrm((1, H)),
        })
    return params


# -----------------------------------------------------------------------------
# Pure-JAX f32 reference (mirrors the PyTorch module's eval forward)
# -----------------------------------------------------------------------------
def gnn_reference(params, x_ids, edge_attr_ids, edge_index, batch, num_graphs):
    L = len(params['layers'])
    H = params['emb_atom'].shape[1]
    h = params['emb_atom'][x_ids]
    vn = jnp.broadcast_to(params['vn_emb'], (num_graphs, H))
    src, dst = edge_index[0], edge_index[1]
    for l, lp in enumerate(params['layers']):
        h_in = h + vn[batch]
        e = lp['emb_bond'][edge_attr_ids]
        s1, t1 = _fold_bn(lp['g1'], lp['be1'], lp['b1'])
        s2, t2 = _fold_bn(lp['gL'], lp['beL'], lp['b2'])
        msg = jnp.maximum(h_in[src] + e, 0.0)
        agg = jnp.zeros_like(h_in).at[dst].add(msg)
        z = (1.0 + lp['eps']) * h_in + agg
        y1 = jnp.maximum(z @ lp['W1'] * s1 + t1, 0.0)
        pre = y1 @ lp['W2'] * s2 + t2
        h = (pre if l == L - 1 else jnp.maximum(pre, 0.0)) + h_in
        if l < L - 1:
            vp = params['vn_mlp'][l]
            vs1, vt1 = _fold_bn(vp['g1'], vp['be1'], vp['b1'])
            vs2, vt2 = _fold_bn(vp['g2'], vp['be2'], vp['b2'])
            vn_tmp = jnp.zeros((num_graphs, H), jnp.float32).at[batch].add(h_in) + vn
            u = jnp.maximum(vn_tmp @ vp['W1'] * vs1 + vt1, 0.0)
            u = jnp.maximum(u @ vp['W2'] * vs2 + vt2, 0.0)
            vn = vn + u
    graph = jnp.full((num_graphs, H), -jnp.inf, jnp.float32).at[batch].max(h)
    return {'graph': graph, 'node': h}


if __name__ == "__main__":
    key = jax.random.PRNGKey(0)
    k_param, k_atom, k_bond = jax.random.split(key, 3)

    num_layer, hidden_size = 2, 32
    num_graphs, nodes_per_graph = 2, 8
    N = num_graphs * nodes_per_graph

    params = init_params(k_param, num_layer, hidden_size)

    # deterministic synthetic graph batch: two 8-node rings (directed both ways)
    x_ids = jax.random.randint(k_atom, (N,), 0, 16)
    batch = jnp.repeat(jnp.arange(num_graphs, dtype=jnp.int32), nodes_per_graph)
    src_list, dst_list = [], []
    for g in range(num_graphs):
        base = g * nodes_per_graph
        for i in range(nodes_per_graph):
            a, b = base + i, base + (i + 1) % nodes_per_graph
            src_list += [a, b]
            dst_list += [b, a]
    edge_index = jnp.array([src_list, dst_list], dtype=jnp.int32)
    E = edge_index.shape[1]
    edge_attr_ids = jax.random.randint(k_bond, (E,), 0, 8)

    out = gnn_forward(params, x_ids, edge_attr_ids, edge_index, batch, num_graphs)
    jax.block_until_ready(out)

    assert out['node'].shape == (N, hidden_size)
    assert out['graph'].shape == (num_graphs, hidden_size)
    assert bool(jnp.all(jnp.isfinite(out['node'])))
    assert bool(jnp.all(jnp.isfinite(out['graph'])))

    ref = gnn_reference(params, x_ids, edge_attr_ids, edge_index, batch, num_graphs)
    assert bool(jnp.allclose(out['node'], ref['node'], atol=5e-2, rtol=5e-2))
    assert bool(jnp.allclose(out['graph'], ref['graph'], atol=5e-2, rtol=5e-2))

    print("KERNEL_OK")
</pallas_src>

<mosaic_0001>
module attributes {stable_mosaic.version = 11 : i64} {
  func.func @_gnn_fused_kernel(%arg0: i32, %arg1: memref<32x1xi32, #tpu.memory_space<vmem>>, %arg2: memref<1x32xi32, #tpu.memory_space<vmem>>, %arg3: memref<16x1xi32, #tpu.memory_space<vmem>>, %arg4: memref<1x16xi32, #tpu.memory_space<vmem>>, %arg5: memref<32x1xi32, #tpu.memory_space<vmem>>, %arg6: memref<16x128xf32, #tpu.memory_space<vmem>>, %arg7: memref<1x128xf32, #tpu.memory_space<vmem>>, %arg8: memref<1x1x128xf32, #tpu.memory_space<vmem>>, %arg9: memref<1x128x128xbf16, #tpu.memory_space<vmem>>, %arg10: memref<1x128x128xbf16, #tpu.memory_space<vmem>>, %arg11: memref<1x1x128xf32, #tpu.memory_space<vmem>>, %arg12: memref<1x128x128xbf16, #tpu.memory_space<vmem>>, %arg13: memref<1x1x128xf32, #tpu.memory_space<vmem>>, %arg14: memref<1x128x128xbf16, #tpu.memory_space<vmem>>, %arg15: memref<1x1x128xf32, #tpu.memory_space<vmem>>, %arg16: memref<1x128x128xbf16, #tpu.memory_space<vmem>>, %arg17: memref<1x1x128xf32, #tpu.memory_space<vmem>>, %arg18: memref<16x128xf32, #tpu.memory_space<vmem>>, %arg19: memref<8x128xf32, #tpu.memory_space<vmem>>, %arg20: memref<8x128xf32, #tpu.memory_space<vmem>>, %arg21: memref<16x8xbf16, #tpu.memory_space<vmem>>, %arg22: memref<8x16xbf16, #tpu.memory_space<vmem>>, %arg23: memref<32x128xbf16, #tpu.memory_space<vmem>>, %arg24: memref<32x16xbf16, #tpu.memory_space<vmem>>, %arg25: memref<16x32xbf16, #tpu.memory_space<vmem>>) attributes {dimension_semantics = [#tpu.dimension_semantics<arbitrary>], iteration_bounds = array<i64: 2>, scalar_prefetch = 0 : i64, scratch_operands = 6 : i64, tpu.core_type = #tpu.core_type<tc>, window_params = [{pipeline_mode = #tpu.pipeline_mode<synchronous>, transform_indices = @transform_0, window_bounds = array<i64: 32, 1>}, {pipeline_mode = #tpu.pipeline_mode<synchronous>, transform_indices = @transform_1, window_bounds = array<i64: 1, 32>}, {pipeline_mode = #tpu.pipeline_mode<synchronous>, transform_indices = @transform_2, window_bounds = array<i64: 16, 1>}, {pipeline_mode = #tpu.pipeline_mode<synchronous>, transform_indices = @transform_3, window_bounds = array<i64: 1, 16>}, {pipeline_mode = #tpu.pipeline_mode<synchronous>, transform_indices = @transform_4, window_bounds = array<i64: 32, 1>}, {pipeline_mode = #tpu.pipeline_mode<synchronous>, transform_indices = @transform_5, window_bounds = array<i64: 16, 128>}, {pipeline_mode = #tpu.pipeline_mode<synchronous>, transform_indices = @transform_6, window_bounds = array<i64: 1, 128>}, {transform_indices = @transform_7, window_bounds = array<i64: 1, 1, 128>}, {transform_indices = @transform_8, window_bounds = array<i64: 1, 128, 128>}, {transform_indices = @transform_9, window_bounds = array<i64: 1, 128, 128>}, {transform_indices = @transform_10, window_bounds = array<i64: 1, 1, 128>}, {transform_indices = @transform_11, window_bounds = array<i64: 1, 128, 128>}, {transform_indices = @transform_12, window_bounds = array<i64: 1, 1, 128>}, {transform_indices = @transform_13, window_bounds = array<i64: 1, 128, 128>}, {transform_indices = @transform_14, window_bounds = array<i64: 1, 1, 128>}, {transform_indices = @transform_15, window_bounds = array<i64: 1, 128, 128>}, {transform_indices = @transform_16, window_bounds = array<i64: 1, 1, 128>}, {pipeline_mode = #tpu.pipeline_mode<synchronous>, transform_indices = @transform_17, window_bounds = array<i64: 16, 128>}, {pipeline_mode = #tpu.pipeline_mode<synchronous>, transform_indices = @transform_18, window_bounds = array<i64: 8, 128>}]} {
    %c0_i32 = arith.constant 0 : i32
    %0 = arith.cmpi eq, %arg0, %c0_i32 : i32
    %1 = arith.extui %0 : i1 to i32
    %c0_i32_0 = arith.constant 0 : i32
    %2 = arith.cmpi ne, %1, %c0_i32_0 : i32
    scf.if %2 {
      %c0_42 = arith.constant 0 : index
      %c0_43 = arith.constant 0 : index
      %56 = vector.load %arg6[%c0_42, %c0_43] : memref<16x128xf32, #tpu.memory_space<vmem>>, vector<16x128xf32>
      %c0_44 = arith.constant 0 : index
      %c0_45 = arith.constant 0 : index
      %57 = vector.load %arg18[%c0_44, %c0_45] : memref<16x128xf32, #tpu.memory_space<vmem>>, vector<16x128xf32>
      tpu.vector_store %arg18[%c0_44, %c0_45], %56 {strides = array<i32>} : memref<16x128xf32, #tpu.memory_space<vmem>>, vector<16x128xf32>,
      %c0_46 = arith.constant 0 : index
      %c0_47 = arith.constant 0 : index
      %58 = vector.load %arg7[%c0_46, %c0_47] : memref<1x128xf32, #tpu.memory_space<vmem>>, vector<1x128xf32>
      %59 = vector.shape_cast %58 : vector<1x128xf32> to vector<1x128xf32>
      %60 = vector.broadcast %59 : vector<1x128xf32> to vector<8x128xf32>
      %c0_48 = arith.constant 0 : index
      %c0_49 = arith.constant 0 : index
      %61 = vector.load %arg20[%c0_48, %c0_49] : memref<8x128xf32, #tpu.memory_space<vmem>>, vector<8x128xf32>
      tpu.vector_store %arg20[%c0_48, %c0_49], %60 {strides = array<i32>} : memref<8x128xf32, #tpu.memory_space<vmem>>, vector<8x128xf32>,
      %62 = tpu.iota {dimensions = array<i32: 1>} : vector<16x8xi32>
      %c0_50 = arith.constant 0 : index
      %c0_51 = arith.constant 0 : index
      %63 = vector.load %arg3[%c0_50, %c0_51] : memref<16x1xi32, #tpu.memory_space<vmem>>, vector<16x1xi32>
      %64 = vector.broadcast %63 : vector<16x1xi32> to vector<16x8xi32>
      %65 = arith.cmpi eq, %62, %64 : vector<16x8xi32>
      %66 = arith.extui %65 : vector<16x8xi1> to vector<16x8xi32>
      %67 = arith.sitofp %66 : vector<16x8xi32> to vector<16x8xf32>
      %68 = arith.truncf %67 : vector<16x8xf32> to vector<16x8xbf16>
      %c0_52 = arith.constant 0 : index
      %c0_53 = arith.constant 0 : index
      %69 = vector.load %arg21[%c0_52, %c0_53] : memref<16x8xbf16, #tpu.memory_space<vmem>>, vector<16x8xbf16>
      tpu.vector_store %arg21[%c0_52, %c0_53], %68 {strides = array<i32>} : memref<16x8xbf16, #tpu.memory_space<vmem>>, vector<16x8xbf16>,
      %70 = tpu.iota {dimensions = array<i32: 0>} : vector<8x16xi32>
      %c0_54 = arith.constant 0 : index
      %c0_55 = arith.constant 0 : index
      %71 = vector.load %arg4[%c0_54, %c0_55] : memref<1x16xi32, #tpu.memory_space<vmem>>, vector<1x16xi32>
      %72 = vector.broadcast %71 : vector<1x16xi32> to vector<8x16xi32>
      %73 = arith.cmpi eq, %70, %72 : vector<8x16xi32>
      %74 = arith.extui %73 : vector<8x16xi1> to vector<8x16xi32>
      %75 = arith.sitofp %74 : vector<8x16xi32> to vector<8x16xf32>
      %76 = arith.truncf %75 : vector<8x16xf32> to vector<8x16xbf16>
      %c0_56 = arith.constant 0 : index
      %c0_57 = arith.constant 0 : index
      %77 = vector.load %arg22[%c0_56, %c0_57] : memref<8x16xbf16, #tpu.memory_space<vmem>>, vector<8x16xbf16>
      tpu.vector_store %arg22[%c0_56, %c0_57], %76 {strides = array<i32>} : memref<8x16xbf16, #tpu.memory_space<vmem>>, vector<8x16xbf16>,
      %78 = tpu.iota {dimensions = array<i32: 1>} : vector<32x128xi32>
      %c0_58 = arith.constant 0 : index
      %c0_59 = arith.constant 0 : index
      %79 = vector.load %arg5[%c0_58, %c0_59] : memref<32x1xi32, #tpu.memory_space<vmem>>, vector<32x1xi32>
      %80 = vector.broadcast %79 : vector<32x1xi32> to vector<32x128xi32>
      %81 = arith.cmpi eq, %78, %80 : vector<32x128xi32>
      %82 = arith.extui %81 : vector<32x128xi1> to vector<32x128xi32>
      %83 = arith.sitofp %82 : vector<32x128xi32> to vector<32x128xf32>
      %84 = arith.truncf %83 : vector<32x128xf32> to vector<32x128xbf16>
      %c0_60 = arith.constant 0 : index
      %c0_61 = arith.constant 0 : index
      %85 = vector.load %arg23[%c0_60, %c0_61] : memref<32x128xbf16, #tpu.memory_space<vmem>>, vector<32x128xbf16>
      tpu.vector_store %arg23[%c0_60, %c0_61], %84 {strides = array<i32>} : memref<32x128xbf16, #tpu.memory_space<vmem>>, vector<32x128xbf16>,
      %86 = tpu.iota {dimensions = array<i32: 1>} : vector<32x16xi32>
      %c0_62 = arith.constant 0 : index
      %c0_63 = arith.constant 0 : index
      %87 = vector.load %arg1[%c0_62, %c0_63] : memref<32x1xi32, #tpu.memory_space<vmem>>, vector<32x1xi32>
      %88 = vector.broadcast %87 : vector<32x1xi32> to vector<32x16xi32>
      %89 = arith.cmpi eq, %86, %88 : vector<32x16xi32>
      %90 = arith.extui %89 : vector<32x16xi1> to vector<32x16xi32>
      %91 = arith.sitofp %90 : vector<32x16xi32> to vector<32x16xf32>
      %92 = arith.truncf %91 : vector<32x16xf32> to vector<32x16xbf16>
      %c0_64 = arith.constant 0 : index
      %c0_65 = arith.constant 0 : index
      %93 = vector.load %arg24[%c0_64, %c0_65] : memref<32x16xbf16, #tpu.memory_space<vmem>>, vector<32x16xbf16>
      tpu.vector_store %arg24[%c0_64, %c0_65], %92 {strides = array<i32>} : memref<32x16xbf16, #tpu.memory_space<vmem>>, vector<32x16xbf16>,
      %94 = tpu.iota {dimensions = array<i32: 0>} : vector<16x32xi32>
      %c0_66 = arith.constant 0 : index
      %c0_67 = arith.constant 0 : index
      %95 = vector.load %arg2[%c0_66, %c0_67] : memref<1x32xi32, #tpu.memory_space<vmem>>, vector<1x32xi32>
      %96 = vector.broadcast %95 : vector<1x32xi32> to vector<16x32xi32>
      %97 = arith.cmpi eq, %94, %96 : vector<16x32xi32>
      %98 = arith.extui %97 : vector<16x32xi1> to vector<16x32xi32>
      %99 = arith.sitofp %98 : vector<16x32xi32> to vector<16x32xf32>
      %100 = arith.truncf %99 : vector<16x32xf32> to vector<16x32xbf16>
      %c0_68 = arith.constant 0 : index
      %c0_69 = arith.constant 0 : index
      %101 = vector.load %arg25[%c0_68, %c0_69] : memref<16x32xbf16, #tpu.memory_space<vmem>>, vector<16x32xbf16>
      tpu.vector_store %arg25[%c0_68, %c0_69], %100 {strides = array<i32>} : memref<16x32xbf16, #tpu.memory_space<vmem>>, vector<16x32xbf16>,
    } else {
    }
    %c0 = arith.constant 0 : index
    %c0_1 = arith.constant 0 : index
    %3 = vector.load %arg18[%c0, %c0_1] : memref<16x128xf32, #tpu.memory_space<vmem>>, vector<16x128xf32>
    %c0_2 = arith.constant 0 : index
    %c0_3 = arith.constant 0 : index
    %4 = vector.load %arg20[%c0_2, %c0_3] : memref<8x128xf32, #tpu.memory_space<vmem>>, vector<8x128xf32>
    %c0_4 = arith.constant 0 : index
    %c0_5 = arith.constant 0 : index
    %5 = vector.load %arg21[%c0_4, %c0_5] : memref<16x8xbf16, #tpu.memory_space<vmem>>, vector<16x8xbf16>
    %6 = arith.truncf %4 : vector<8x128xf32> to vector<8x128xbf16>
    %cst = arith.constant dense<0.000000e+00> : vector<16x128xf32>
    %7 = tpu.matmul %5, %6, %cst {dimension_numbers = #tpu.dot_dimension_numbers<[1], [0], [0], [1], [0, 0, 1, 1], [], []>} : vector<16x8xbf16>, vector<8x128xbf16>, vector<16x128xf32> -> vector<16x128xf32>
    %8 = arith.addf %3, %7 : vector<16x128xf32>
    %9 = arith.truncf %8 : vector<16x128xf32> to vector<16x128xbf16>
    %c0_6 = arith.constant 0 : index
    %c0_7 = arith.constant 0 : index
    %c0_8 = arith.constant 0 : index
    %10 = vector.load %arg9[%c0_6, %c0_7, %c0_8] : memref<1x128x128xbf16, #tpu.memory_space<vmem>>, vector<1x128x128xbf16>
    %11 = vector.shape_cast %10 : vector<1x128x128xbf16> to vector<128x128xbf16>
    %c0_9 = arith.constant 0 : index
    %c0_10 = arith.constant 0 : index
    %12 = vector.load %arg24[%c0_9, %c0_10] : memref<32x16xbf16, #tpu.memory_space<vmem>>, vector<32x16xbf16>
    %c0_11 = arith.constant 0 : index
    %c0_12 = arith.constant 0 : index
    %13 = vector.load %arg25[%c0_11, %c0_12] : memref<16x32xbf16, #tpu.memory_space<vmem>>, vector<16x32xbf16>
    %c0_13 = arith.constant 0 : index
    %c0_14 = arith.constant 0 : index
    %14 = vector.load %arg23[%c0_13, %c0_14] : memref<32x128xbf16, #tpu.memory_space<vmem>>, vector<32x128xbf16>
    %cst_15 = arith.constant dense<0.000000e+00> : vector<32x128xf32>
    %15 = tpu.matmul %14, %11, %cst_15 {dimension_numbers = #tpu.dot_dimension_numbers<[1], [0], [0], [1], [0, 0, 1, 1], [], []>} : vector<32x128xbf16>, vector<128x128xbf16>, vector<32x128xf32> -> vector<32x128xf32>
    %cst_16 = arith.constant dense<0.000000e+00> : vector<32x128xf32>
    %16 = tpu.matmul %12, %9, %cst_16 {dimension_numbers = #tpu.dot_dimension_numbers<[1], [0], [0], [1], [0, 0, 1, 1], [], []>} : vector<32x16xbf16>, vector<16x128xbf16>, vector<32x128xf32> -> vector<32x128xf32>
    %17 = arith.addf %16, %15 : vector<32x128xf32>
    %cst_17 = arith.constant 0.000000e+00 : f32
    %18 = vector.broadcast %cst_17 : f32 to vector<32x128xf32>
    %19 = arith.maximumf %17, %18 : vector<32x128xf32>
    %20 = arith.truncf %19 : vector<32x128xf32> to vector<32x128xbf16>
    %cst_18 = arith.constant dense<0.000000e+00> : vector<16x128xf32>
    %21 = tpu.matmul %13, %20, %cst_18 {dimension_numbers = #tpu.dot_dimension_numbers<[1], [0], [0], [1], [0, 0, 1, 1], [], []>} : vector<16x32xbf16>, vector<32x128xbf16>, vector<16x128xf32> -> vector<16x128xf32>
    %c0_19 = arith.constant 0 : index
    %c0_20 = arith.constant 0 : index
    %c0_21 = arith.constant 0 : index
    %22 = vector.load %arg8[%c0_19, %c0_20, %c0_21] : memref<1x1x128xf32, #tpu.memory_space<vmem>>, vector<1x1x128xf32>
    %23 = vector.shape_cast %22 : vector<1x1x128xf32> to vector<1x128xf32>
    %24 = vector.broadcast %23 : vector<1x128xf32> to vector<16x128xf32>
    %25 = arith.mulf %24, %8 : vector<16x128xf32>
    %26 = arith.addf %25, %21 : vector<16x128xf32>
    %27 = arith.truncf %26 : vector<16x128xf32> to vector<16x128xbf16>
    %c0_22 = arith.constant 0 : index
    %c0_23 = arith.constant 0 : index
    %c0_24 = arith.constant 0 : index
    %28 = vector.load %arg10[%c0_22, %c0_23, %c0_24] : memref<1x128x128xbf16, #tpu.memory_space<vmem>>, vector<1x128x128xbf16>
    %29 = vector.shape_cast %28 : vector<1x128x128xbf16> to vector<128x128xbf16>
    %cst_25 = arith.constant dense<0.000000e+00> : vector<16x128xf32>
    %30 = tpu.matmul %27, %29, %cst_25 {dimension_numbers = #tpu.dot_dimension_numbers<[1], [0], [0], [1], [0, 0, 1, 1], [], []>} : vector<16x128xbf16>, vector<128x128xbf16>, vector<16x128xf32> -> vector<16x128xf32>
    %c0_26 = arith.constant 0 : index
    %c0_27 = arith.constant 0 : index
    %c0_28 = arith.constant 0 : index
    %31 = vector.load %arg11[%c0_26, %c0_27, %c0_28] : memref<1x1x128xf32, #tpu.memory_space<vmem>>, vector<1x1x128xf32>
    %32 = vector.shape_cast %31 : vector<1x1x128xf32> to vector<1x128xf32>
    %33 = vector.broadcast %32 : vector<1x128xf32> to vector<16x128xf32>
    %34 = arith.addf %30, %33 : vector<16x128xf32>
    %cst_29 = arith.constant 0.000000e+00 : f32
    %35 = vector.broadcast %cst_29 : f32 to vector<16x128xf32>
    %36 = arith.maximumf %34, %35 : vector<16x128xf32>
    %37 = arith.truncf %36 : vector<16x128xf32> to vector<16x128xbf16>
    %c0_30 = arith.constant 0 : index
    %c0_31 = arith.constant 0 : index
    %c0_32 = arith.constant 0 : index
    %38 = vector.load %arg12[%c0_30, %c0_31, %c0_32] : memref<1x128x128xbf16, #tpu.memory_space<vmem>>, vector<1x128x128xbf16>
    %39 = vector.shape_cast %38 : vector<1x128x128xbf16> to vector<128x128xbf16>
    %cst_33 = arith.constant dense<0.000000e+00> : vector<16x128xf32>
    %40 = tpu.matmul %37, %39, %cst_33 {dimension_numbers = #tpu.dot_dimension_numbers<[1], [0], [0], [1], [0, 0, 1, 1], [], []>} : vector<16x128xbf16>, vector<128x128xbf16>, vector<16x128xf32> -> vector<16x128xf32>
    %c0_34 = arith.constant 0 : index
    %c0_35 = arith.constant 0 : index
    %c0_36 = arith.constant 0 : index
    %41 = vector.load %arg13[%c0_34, %c0_35, %c0_36] : memref<1x1x128xf32, #tpu.memory_space<vmem>>, vector<1x1x128xf32>
    %42 = vector.shape_cast %41 : vector<1x1x128xf32> to vector<1x128xf32>
    %43 = vector.broadcast %42 : vector<1x128xf32> to vector<16x128xf32>
    %44 = arith.addf %40, %43 : vector<16x128xf32>
    %c1_i32 = arith.constant 1 : i32
    %45 = arith.cmpi eq, %arg0, %c1_i32 : i32
    %cst_37 = arith.constant 0.000000e+00 : f32
    %46 = vector.broadcast %cst_37 : f32 to vector<16x128xf32>
    %47 = arith.maximumf %44, %46 : vector<16x128xf32>
    %48 = arith.select %45, %44, %47 : vector<16x128xf32>
    %49 = arith.addf %48, %8 : vector<16x128xf32>
    %c0_38 = arith.constant 0 : index
    %c0_39 = arith.constant 0 : index
    %50 = vector.load %arg18[%c0_38, %c0_39] : memref<16x128xf32, #tpu.memory_space<vmem>>, vector<16x128xf32>
    tpu.vector_store %arg18[%c0_38, %c0_39], %49 {strides = array<i32>} : memref<16x128xf32, #tpu.memory_space<vmem>>, vector<16x128xf32>,
    %true = arith.constant true
    %51 = arith.xori %45, %true : i1
    %52 = arith.extui %51 : i1 to i32
    %c0_i32_40 = arith.constant 0 : i32
    %53 = arith.cmpi ne, %52, %c0_i32_40 : i32
    scf.if %53 {
      %c0_42 = arith.constant 0 : index
      %c0_43 = arith.constant 0 : index
      %56 = vector.load %arg22[%c0_42, %c0_43] : memref<8x16xbf16, #tpu.memory_space<vmem>>, vector<8x16xbf16>
      %cst_44 = arith.constant dense<0.000000e+00> : vector<8x128xf32>
      %57 = tpu.matmul %56, %9, %cst_44 {dimension_numbers = #tpu.dot_dimension_numbers<[1], [0], [0], [1], [0, 0, 1, 1], [], []>} : vector<8x16xbf16>, vector<16x128xbf16>, vector<8x128xf32> -> vector<8x128xf32>
      %58 = arith.addf %57, %4 : vector<8x128xf32>
      %59 = arith.truncf %58 : vector<8x128xf32> to vector<8x128xbf16>
      %c0_45 = arith.constant 0 : index
      %c0_46 = arith.constant 0 : index
      %c0_47 = arith.constant 0 : index
      %60 = vector.load %arg14[%c0_45, %c0_46, %c0_47] : memref<1x128x128xbf16, #tpu.memory_space<vmem>>, vector<1x128x128xbf16>
      %61 = vector.shape_cast %60 : vector<1x128x128xbf16> to vector<128x128xbf16>
      %cst_48 = arith.constant dense<0.000000e+00> : vector<8x128xf32>
      %62 = tpu.matmul %59, %61, %cst_48 {dimension_numbers = #tpu.dot_dimension_numbers<[1], [0], [0], [1], [0, 0, 1, 1], [], []>} : vector<8x128xbf16>, vector<128x128xbf16>, vector<8x128xf32> -> vector<8x128xf32>
      %c0_49 = arith.constant 0 : index
      %c0_50 = arith.constant 0 : index
      %c0_51 = arith.constant 0 : index
      %63 = vector.load %arg15[%c0_49, %c0_50, %c0_51] : memref<1x1x128xf32, #tpu.memory_space<vmem>>, vector<1x1x128xf32>
      %64 = vector.shape_cast %63 : vector<1x1x128xf32> to vector<1x128xf32>
      %65 = vector.broadcast %64 : vector<1x128xf32> to vector<8x128xf32>
      %66 = arith.addf %62, %65 : vector<8x128xf32>
      %cst_52 = arith.constant 0.000000e+00 : f32
      %67 = vector.broadcast %cst_52 : f32 to vector<8x128xf32>
      %68 = arith.maximumf %66, %67 : vector<8x128xf32>
      %69 = arith.truncf %68 : vector<8x128xf32> to vector<8x128xbf16>
      %c0_53 = arith.constant 0 : index
      %c0_54 = arith.constant 0 : index
      %c0_55 = arith.constant 0 : index
      %70 = vector.load %arg16[%c0_53, %c0_54, %c0_55] : memref<1x128x128xbf16, #tpu.memory_space<vmem>>, vector<1x128x128xbf16>
      %71 = vector.shape_cast %70 : vector<1x128x128xbf16> to vector<128x128xbf16>
      %cst_56 = arith.constant dense<0.000000e+00> : vector<8x128xf32>
      %72 = tpu.matmul %69, %71, %cst_56 {dimension_numbers = #tpu.dot_dimension_numbers<[1], [0], [0], [1], [0, 0, 1, 1], [], []>} : vector<8x128xbf16>, vector<128x128xbf16>, vector<8x128xf32> -> vector<8x128xf32>
      %c0_57 = arith.constant 0 : index
      %c0_58 = arith.constant 0 : index
      %c0_59 = arith.constant 0 : index
      %73 = vector.load %arg17[%c0_57, %c0_58, %c0_59] : memref<1x1x128xf32, #tpu.memory_space<vmem>>, vector<1x1x128xf32>
      %74 = vector.shape_cast %73 : vector<1x1x128xf32> to vector<1x128xf32>
      %75 = vector.broadcast %74 : vector<1x128xf32> to vector<8x128xf32>
      %76 = arith.addf %72, %75 : vector<8x128xf32>
      %cst_60 = arith.constant 0.000000e+00 : f32
      %77 = vector.broadcast %cst_60 : f32 to vector<8x128xf32>
      %78 = arith.maximumf %76, %77 : vector<8x128xf32>
      %79 = arith.addf %4, %78 : vector<8x128xf32>
      %c0_61 = arith.constant 0 : index
      %c0_62 = arith.constant 0 : index
      %80 = vector.load %arg20[%c0_61, %c0_62] : memref<8x128xf32, #tpu.memory_space<vmem>>, vector<8x128xf32>
      tpu.vector_store %arg20[%c0_61, %c0_62], %79 {strides = array<i32>} : memref<8x128xf32, #tpu.memory_space<vmem>>, vector<8x128xf32>,
    } else {
    }
    %54 = arith.extui %45 : i1 to i32
    %c0_i32_41 = arith.constant 0 : i32
    %55 = arith.cmpi ne, %54, %c0_i32_41 : i32
    scf.if %55 {
      %cst_42 = arith.constant -3.000000e+38 : f32
      %56 = vector.broadcast %cst_42 : f32 to vector<8x128xf32>
      %cst_43 = arith.constant -3.000000e+38 : f32
      %c0_i32_44 = arith.constant 0 : i32
      %c8_i32 = arith.constant 8 : i32
      %57 = arith.addi %c0_i32_44, %c8_i32 : i32
      %c1_i32_45 = arith.constant 1 : i32
      %58 = scf.for %arg26 = %c0_i32_44 to %57 step %c1_i32_45 iter_args(%arg27 = %56) -> (vector<8x128xf32>)  : i32 {
        %c0_49 = arith.constant 0 : index
        %c0_50 = arith.constant 0 : index
        %60 = vector.load %arg3[%c0_49, %c0_50] : memref<16x1xi32, #tpu.memory_space<vmem>>, vector<16x1xi32>
        %61 = vector.broadcast %arg26 : i32 to vector<16x1xi32>
        %62 = arith.cmpi eq, %60, %61 : vector<16x1xi32>
        %63 = vector.shape_cast %62 : vector<16x1xi1> to vector<16x1xi1>
        %64 = vector.broadcast %63 : vector<16x1xi1> to vector<16x128xi1>
        %65 = vector.broadcast %cst_43 : f32 to vector<16x128xf32>
        %66 = arith.select %64, %49, %65 : vector<16x128xi1>, vector<16x128xf32>
        %cst_51 = arith.constant dense<0xFF800000> : vector<128xf32>
        %67 = vector.multi_reduction <maximumf>, %66, %cst_51 [0] : vector<16x128xf32> to vector<128xf32>
        %68 = vector.shape_cast %67 : vector<128xf32> to vector<1x128xf32>
        %69 = tpu.iota {dimensions = array<i32: 0>} : vector<8x1xi32>
        %70 = vector.broadcast %arg26 : i32 to vector<8x1xi32>
        %71 = arith.cmpi eq, %69, %70 : vector<8x1xi32>
        %72 = vector.shape_cast %71 : vector<8x1xi1> to vector<8x1xi1>
        %73 = vector.broadcast %72 : vector<8x1xi1> to vector<8x128xi1>
        %74 = vector.shape_cast %68 : vector<1x128xf32> to vector<1x128xf32>
        %75 = vector.broadcast %74 : vector<1x128xf32> to vector<8x128xf32>
        %76 = arith.select %73, %75, %arg27 : vector<8x128xi1>, vector<8x128xf32>
        scf.yield %76 : vector<8x128xf32>
      }
      %c8_i32_46 = arith.constant 8 : i32
      %c0_47 = arith.constant 0 : index
      %c0_48 = arith.constant 0 : index
      %59 = vector.load %arg19[%c0_47, %c0_48] : memref<8x128xf32, #tpu.memory_space<vmem>>, vector<8x128xf32>
      tpu.vector_store %arg19[%c0_47, %c0_48], %58 {strides = array<i32>} : memref<8x128xf32, #tpu.memory_space<vmem>>, vector<8x128xf32>,
    } else {
    }
    return
  }
  func.func @transform_0(%arg0: i32) -> (i32, i32) {
    %c0_i32 = arith.constant 0 : i32
    %c0_i32_0 = arith.constant 0 : i32
    %c0_i32_1 = arith.constant 0 : i32
    return %c0_i32, %c0_i32_0 : i32, i32
  }
  func.func @transform_1(%arg0: i32) -> (i32, i32) {
    %c0_i32 = arith.constant 0 : i32
    %c0_i32_0 = arith.constant 0 : i32
    %c0_i32_1 = arith.constant 0 : i32
    return %c0_i32, %c0_i32_0 : i32, i32
  }
  func.func @transform_2(%arg0: i32) -> (i32, i32) {
    %c0_i32 = arith.constant 0 : i32
    %c0_i32_0 = arith.constant 0 : i32
    %c0_i32_1 = arith.constant 0 : i32
    return %c0_i32, %c0_i32_0 : i32, i32
  }
  func.func @transform_3(%arg0: i32) -> (i32, i32) {
    %c0_i32 = arith.constant 0 : i32
    %c0_i32_0 = arith.constant 0 : i32
    %c0_i32_1 = arith.constant 0 : i32
    return %c0_i32, %c0_i32_0 : i32, i32
  }
  func.func @transform_4(%arg0: i32) -> (i32, i32) {
    %c0_i32 = arith.constant 0 : i32
    %c0_i32_0 = arith.constant 0 : i32
    %c0_i32_1 = arith.constant 0 : i32
    return %c0_i32, %c0_i32_0 : i32, i32
  }
  func.func @transform_5(%arg0: i32) -> (i32, i32) {
    %c0_i32 = arith.constant 0 : i32
    %c0_i32_0 = arith.constant 0 : i32
    %c0_i32_1 = arith.constant 0 : i32
    return %c0_i32, %c0_i32_0 : i32, i32
  }
  func.func @transform_6(%arg0: i32) -> (i32, i32) {
    %c0_i32 = arith.constant 0 : i32
    %c0_i32_0 = arith.constant 0 : i32
    %c0_i32_1 = arith.constant 0 : i32
    return %c0_i32, %c0_i32_0 : i32, i32
  }
  func.func @transform_7(%arg0: i32) -> (i32, i32, i32) {
    %c0_i32 = arith.constant 0 : i32
    %c0_i32_0 = arith.constant 0 : i32
    %c0_i32_1 = arith.constant 0 : i32
    return %arg0, %c0_i32, %c0_i32_0 : i32, i32, i32
  }
  func.func @transform_8(%arg0: i32) -> (i32, i32, i32) {
    %c0_i32 = arith.constant 0 : i32
    %c0_i32_0 = arith.constant 0 : i32
    %c0_i32_1 = arith.constant 0 : i32
    return %arg0, %c0_i32, %c0_i32_0 : i32, i32, i32
  }
  func.func @transform_9(%arg0: i32) -> (i32, i32, i32) {
    %c0_i32 = arith.constant 0 : i32
    %c0_i32_0 = arith.constant 0 : i32
    %c0_i32_1 = arith.constant 0 : i32
    return %arg0, %c0_i32, %c0_i32_0 : i32, i32, i32
  }
  func.func @transform_10(%arg0: i32) -> (i32, i32, i32) {
    %c0_i32 = arith.constant 0 : i32
    %c0_i32_0 = arith.constant 0 : i32
    %c0_i32_1 = arith.constant 0 : i32
    return %arg0, %c0_i32, %c0_i32_0 : i32, i32, i32
  }
  func.func @transform_11(%arg0: i32) -> (i32, i32, i32) {
    %c0_i32 = arith.constant 0 : i32
    %c0_i32_0 = arith.constant 0 : i32
    %c0_i32_1 = arith.constant 0 : i32
    return %arg0, %c0_i32, %c0_i32_0 : i32, i32, i32
  }
  func.func @transform_12(%arg0: i32) -> (i32, i32, i32) {
    %c0_i32 = arith.constant 0 : i32
    %c0_i32_0 = arith.constant 0 : i32
    %c0_i32_1 = arith.constant 0 : i32
    return %arg0, %c0_i32, %c0_i32_0 : i32, i32, i32
  }
  func.func @transform_13(%arg0: i32) -> (i32, i32, i32) {
    %c0_i32 = arith.constant 0 : i32
    %0 = arith.minsi %arg0, %c0_i32 : i32
    %c0_i32_0 = arith.constant 0 : i32
    %c0_i32_1 = arith.constant 0 : i32
    %c0_i32_2 = arith.constant 0 : i32
    return %0, %c0_i32_0, %c0_i32_1 : i32, i32, i32
  }
  func.func @transform_14(%arg0: i32) -> (i32, i32, i32) {
    %c0_i32 = arith.constant 0 : i32
    %0 = arith.minsi %arg0, %c0_i32 : i32
    %c0_i32_0 = arith.constant 0 : i32
    %c0_i32_1 = arith.constant 0 : i32
    %c0_i32_2 = arith.constant 0 : i32
    return %0, %c0_i32_0, %c0_i32_1 : i32, i32, i32
  }
  func.func @transform_15(%arg0: i32) -> (i32, i32, i32) {
    %c0_i32 = arith.constant 0 : i32
    %0 = arith.minsi %arg0, %c0_i32 : i32
    %c0_i32_0 = arith.constant 0 : i32
    %c0_i32_1 = arith.constant 0 : i32
    %c0_i32_2 = arith.constant 0 : i32
    return %0, %c0_i32_0, %c0_i32_1 : i32, i32, i32
  }
  func.func @transform_16(%arg0: i32) -> (i32, i32, i32) {
    %c0_i32 = arith.constant 0 : i32
    %0 = arith.minsi %arg0, %c0_i32 : i32
    %c0_i32_0 = arith.constant 0 : i32
    %c0_i32_1 = arith.constant 0 : i32
    %c0_i32_2 = arith.constant 0 : i32
    return %0, %c0_i32_0, %c0_i32_1 : i32, i32, i32
  }
  func.func @transform_17(%arg0: i32) -> (i32, i32) {
    %c0_i32 = arith.constant 0 : i32
    %c0_i32_0 = arith.constant 0 : i32
    %c0_i32_1 = arith.constant 0 : i32
    return %c0_i32, %c0_i32_0 : i32, i32
  }
  func.func @transform_18(%arg0: i32) -> (i32, i32) {
    %c0_i32 = arith.constant 0 : i32
    %c0_i32_0 = arith.constant 0 : i32
    %c0_i32_1 = arith.constant 0 : i32
    return %c0_i32, %c0_i32_0 : i32, i32
  }
}

</mosaic_0001>

<llo_original>
// kernel: tpu_custom_call.1
$region0: #{tpu_custom_call.1}
  #allocation0 [shape = 'u32[]', space=smem, size = 0x4, offset = 0x4, fixed_abs, tag = 'smem constant byte address 0x4 - core index']
  #allocation1 [shape = 'u32[144,128]{1,0:T(1,128)}', space=vmem, size = 0x12000, scoped, tag = 'internal scratch']
  #allocation2 [shape = 'f32[8,128]{1,0:T(8,128)}', space=vmem, size = 0x1000, scoped, tag = 'scratch operand']
  #allocation3 [shape = 'bf16[16,8]{1,0:T(16,128)(2,1)}', space=vmem, size = 0x1000, scoped, tag = 'scratch operand']
  #allocation4 [shape = 'bf16[8,16]{1,0:T(8,128)(2,1)}', space=vmem, size = 0x800, scoped, tag = 'scratch operand']
  #allocation5 [shape = 'bf16[32,128]{1,0:T(16,128)(2,1)}', space=vmem, size = 0x2000, scoped, tag = 'scratch operand']
  #allocation6 [shape = 'bf16[32,16]{1,0:T(16,128)(2,1)}', space=vmem, size = 0x2000, scoped, tag = 'scratch operand']
  #allocation7 [shape = 'bf16[16,32]{1,0:T(16,128)(2,1)}', space=vmem, size = 0x1000, scoped, tag = 'scratch operand']
  %s0 = inlined_call_operand.vmem [shape: s32[32,1], index: 0, kind: input, shape index: {}]
  %s1 = inlined_call_operand.hbm [shape: s32[1,32], index: 1, kind: input, shape index: {}]
  %s2 = inlined_call_operand.vmem [shape: s32[16,1], index: 2, kind: input, shape index: {}]
  %s3 = inlined_call_operand.hbm [shape: s32[1,16], index: 3, kind: input, shape index: {}]
  %s4 = inlined_call_operand.vmem [shape: s32[32,1], index: 4, kind: input, shape index: {}]
  %s5 = inlined_call_operand.hbm [shape: f32[16,128], index: 5, kind: input, shape index: {}]
  %s6 = inlined_call_operand.hbm [shape: f32[1,128], index: 6, kind: input, shape index: {}]
  %s7 = inlined_call_operand.hbm [shape: f32[2,1,128], index: 7, kind: input, shape index: {}]
  %s8 = inlined_call_operand.hbm [shape: bf16[2,128,128], index: 8, kind: input, shape index: {}]
  %s9 = inlined_call_operand.hbm [shape: bf16[2,128,128], index: 9, kind: input, shape index: {}]
  %s10 = inlined_call_operand.hbm [shape: f32[2,1,128], index: 10, kind: input, shape index: {}]
  %s11 = inlined_call_operand.hbm [shape: bf16[2,128,128], index: 11, kind: input, shape index: {}]
  %s12 = inlined_call_operand.hbm [shape: f32[2,1,128], index: 12, kind: input, shape index: {}]
  %s13 = inlined_call_operand.vmem [shape: bf16[1,128,128], index: 13, kind: input, shape index: {}]
  %s14 = inlined_call_operand.vmem [shape: f32[1,1,128], index: 14, kind: input, shape index: {}]
  %s15 = inlined_call_operand.vmem [shape: bf16[1,128,128], index: 15, kind: input, shape index: {}]
  %s16 = inlined_call_operand.vmem [shape: f32[1,1,128], index: 16, kind: input, shape index: {}]
  %s17 = inlined_call_operand.hbm [shape: f32[16,128], index: 17, kind: output, shape index: {0}]
  %s18 = inlined_call_operand.hbm [shape: f32[8,128], index: 18, kind: output, shape index: {1}]
  %19 = xla_tuple %s17, %s18
  %s20 = sld [smem:[#allocation0]]
  $region168: #{tpu_custom_call.1} parent=0
    _
  %s22 = ssub.s32 1, %s20
  %s23 = scalar_select 0, %s22, %s20
  $region1: #{tpu_custom_call.1} parent=0
    #allocation8 [shape = 'u8[512]{0}', space=vmem, size = 0x400, scoped, tag = 'input window, operand 1, single buffered']
    #allocation9 [shape = 's32[2]{0}', space=sflag, size = 0x8, scoped, tag = 'scoped memory for tpu_custom_call.1']
    #allocation10 [shape = 's32[2]{0}', space=sflag, size = 0x8, scoped, tag = 'scoped memory for tpu_custom_call.1']
    #allocation11 [shape = 'u8[512]{0}', space=vmem, size = 0x400, scoped, tag = 'input window, operand 3, single buffered']
    #allocation12 [shape = 's32[1]{0}', space=sflag, size = 0x4, scoped, tag = 'scoped memory for tpu_custom_call.1']
    #allocation13 [shape = 'u8[8192]{0}', space=vmem, size = 0x2000, scoped, tag = 'input window, operand 5, single buffered']
    #allocation14 [shape = 'u8[512]{0}', space=vmem, size = 0x400, scoped, tag = 'input window, operand 6, single buffered']
    #allocation15 [shape = 's32[1]{0}', space=sflag, size = 0x4, scoped, tag = 'scoped memory for tpu_custom_call.1']
    #allocation16 [shape = 'u8[1024]{0}', space=vmem, size = 0x400, scoped, tag = 'input window, operand 7']
    #allocation17 [shape = 'u8[65536]{0}', space=vmem, size = 0x10000, scoped, tag = 'input window, operand 8']
    #allocation18 [shape = 'u8[65536]{0}', space=vmem, size = 0x10000, scoped, tag = 'input window, operand 9']
    #allocation19 [shape = 'u8[1024]{0}', space=vmem, size = 0x400, scoped, tag = 'input window, operand 10']
    #allocation20 [shape = 'u8[65536]{0}', space=vmem, size = 0x10000, scoped, tag = 'input window, operand 11']
    #allocation21 [shape = 'u8[1024]{0}', space=vmem, size = 0x400, scoped, tag = 'input window, operand 12']
    #allocation22 [shape = 'u8[8192]{0}', space=vmem, size = 0x2000, scoped, tag = 'output window, operand 0, single buffered']
    #allocation23 [shape = 'u8[4096]{0}', space=vmem, size = 0x1000, scoped, tag = 'output window, operand 1, single buffered']
    #allocation24 [shape = 's32[1]{0}', space=sflag, size = 0x4, scoped, tag = 'scoped memory for tpu_custom_call.1']
    %24 = vsyncpa [#allocation9], 0
    %25 = vsyncpa [#allocation12], 0
    %26 = vsyncpa [#allocation15], 0
    %27 = vsyncpa [#allocation10], 0
    %28 = vsyncpa [#allocation24], 0
    loop: start=0, step=1, limit=4
    $region2: #{tpu_custom_call.1} parent=1 // loop_pre_header
      _
    $region3: #{tpu_custom_call.1} parent=1 // loop_header
      %s30 = sphi 0, %s34
      %p31 = scmp.ge.s32.totalorder %s30, 4
      %s38 = sphi 0, %s38
      %s40 = sphi 0, %s38
      %s41 = sphi 0, %s40
      %s55 = sphi 0, %s41
      %s59 = sphi 0, %s59
      %s61 = sphi 0, %s59
      %s62 = sphi 0, %s61
      %s76 = sphi 0, %s62
      %s80 = sphi 0, %s80
      %s82 = sphi 0, %s80
      %s83 = sphi 0, %s82
      %s97 = sphi 0, %s83
      %s101 = sphi 0, %s101
      %s103 = sphi 0, %s101
      %s104 = sphi 0, %s103
      %s118 = sphi 0, %s104
      %s122 = sphi 0, %s122
      %s124 = sphi 0, %s122
      %s125 = sphi 0, %s124
      %s139 = sphi 0, %s125
      %s143 = sphi 0, %s143
      %s145 = sphi 0, %s143
      %s146 = sphi 0, %s145
      %s160 = sphi 0, %s146
      %s164 = sphi 0, %s164
      %s166 = sphi 0, %s164
      %s167 = sphi 0, %s166
      %s181 = sphi 0, %s167
      %s187 = sphi 0, %s189
      %s190 = sphi 0, %s187
      %s191 = sphi 0, %s190
      %s207 = sphi 0, %s191
      %s213 = sphi 0, %s215
      %s216 = sphi 0, %s213
      %s217 = sphi 0, %s216
      %s233 = sphi 0, %s217
      %s239 = sphi 0, %s241
      %s242 = sphi 0, %s239
      %s243 = sphi 0, %s242
      %s259 = sphi 0, %s243
      %s265 = sphi 0, %s267
      %s268 = sphi 0, %s265
      %s269 = sphi 0, %s268
      %s285 = sphi 0, %s269
      %s291 = sphi 0, %s293
      %s294 = sphi 0, %s291
      %s295 = sphi 0, %s294
      %s311 = sphi 0, %s295
      %s317 = sphi 0, %s319
      %s320 = sphi 0, %s317
      %s321 = sphi 0, %s320
      %s337 = sphi 0, %s321
      %s347 = sphi 0, %s349
      %s350 = sphi 0, %s347
      %s351 = sphi 0, %s350
      %s367 = sphi 0, %s351
      %s377 = sphi 0, %s379
      %s380 = sphi 0, %s377
      %s381 = sphi 0, %s380
      %s397 = sphi 0, %s381
      %s407 = sphi 0, %s409
      %s410 = sphi 0, %s407
      %s411 = sphi 0, %s410
      %s427 = sphi 0, %s411
      %s437 = sphi 0, %s439
      %s440 = sphi 0, %s437
      %s441 = sphi 0, %s440
      %s457 = sphi 0, %s441
      %s461 = sphi 0, %s461
      %s463 = sphi 0, %s461
      %s464 = sphi 0, %s463
      %s478 = sphi 0, %s464
      %s482 = sphi 0, %s482
      %s484 = sphi 0, %s482
      %s485 = sphi 0, %s484
      %s499 = sphi 0, %s485
    $region4: #{tpu_custom_call.1} parent=1 // loop_header_branch
      %33 = sbr.rel (%p31) target = $region8
    $region5: #{tpu_custom_call.1} parent=1 // loop_body
      %s35 = ssub.s32 %s30, 1
      %s36 = ssub.s32 %s30, 2
      %s37 = sadd.s32 %s30, 1
      %s39 = sadd.s32 %s38, 1
      %p42 = scmp.eq.s32.totalorder %s30, 1
      %p43 = scmp.ne.s32.totalorder %s38, %s40
      %p44 = scmp.eq.s32.totalorder %s30, 0
      %p45 = por %p43, %p44
      %p46 = scmp.ne.s32.totalorder %s38, %s40
      %p47 = scmp.eq.s32.totalorder %s35, 1
      %p48 = por %p46, %p47
      %p49 = scmp.ne.s32.totalorder %s40, %s41
      %p50 = scmp.eq.s32.totalorder %s35, 0
      %p51 = por %p49, %p50
      %p52 = scmp.ne.s32.totalorder %s40, %s41
      %p53 = scmp.eq.s32.totalorder %s36, 1
      %p54 = por %p52, %p53
      %p56 = scmp.ne.s32.totalorder %s41, %s55
      %p57 = scmp.eq.s32.totalorder %s36, 0
      %p58 = por %p56, %p57
      %s60 = sadd.s32 %s59, 1
      %p63 = scmp.eq.s32.totalorder %s30, 1
      %p64 = scmp.ne.s32.totalorder %s59, %s61
      %p65 = scmp.eq.s32.totalorder %s30, 0
      %p66 = por %p64, %p65
      %p67 = scmp.ne.s32.totalorder %s59, %s61
      %p68 = scmp.eq.s32.totalorder %s35, 1
      %p69 = por %p67, %p68
      %p70 = scmp.ne.s32.totalorder %s61, %s62
      %p71 = scmp.eq.s32.totalorder %s35, 0
      %p72 = por %p70, %p71
      %p73 = scmp.ne.s32.totalorder %s61, %s62
      %p74 = scmp.eq.s32.totalorder %s36, 1
      %p75 = por %p73, %p74
      %p77 = scmp.ne.s32.totalorder %s62, %s76
      %p78 = scmp.eq.s32.totalorder %s36, 0
      %p79 = por %p77, %p78
      %s81 = sadd.s32 %s80, 1
      %p84 = scmp.eq.s32.totalorder %s30, 1
      %p85 = scmp.ne.s32.totalorder %s80, %s82
      %p86 = scmp.eq.s32.totalorder %s30, 0
      %p87 = por %p85, %p86
      %p88 = scmp.ne.s32.totalorder %s80, %s82
      %p89 = scmp.eq.s32.totalorder %s35, 1
      %p90 = por %p88, %p89
      %p91 = scmp.ne.s32.totalorder %s82, %s83
      %p92 = scmp.eq.s32.totalorder %s35, 0
      %p93 = por %p91, %p92
      %p94 = scmp.ne.s32.totalorder %s82, %s83
      %p95 = scmp.eq.s32.totalorder %s36, 1
      %p96 = por %p94, %p95
      %p98 = scmp.ne.s32.totalorder %s83, %s97
      %p99 = scmp.eq.s32.totalorder %s36, 0
      %p100 = por %p98, %p99
      %s102 = sadd.s32 %s101, 1
      %p105 = scmp.eq.s32.totalorder %s30, 1
      %p106 = scmp.ne.s32.totalorder %s101, %s103
      %p107 = scmp.eq.s32.totalorder %s30, 0
      %p108 = por %p106, %p107
      %p109 = scmp.ne.s32.totalorder %s101, %s103
      %p110 = scmp.eq.s32.totalorder %s35, 1
      %p111 = por %p109, %p110
      %p112 = scmp.ne.s32.totalorder %s103, %s104
      %p113 = scmp.eq.s32.totalorder %s35, 0
      %p114 = por %p112, %p113
      %p115 = scmp.ne.s32.totalorder %s103, %s104
      %p116 = scmp.eq.s32.totalorder %s36, 1
      %p117 = por %p115, %p116
      %p119 = scmp.ne.s32.totalorder %s104, %s118
      %p120 = scmp.eq.s32.totalorder %s36, 0
      %p121 = por %p119, %p120
      %s123 = sadd.s32 %s122, 1
      %p126 = scmp.eq.s32.totalorder %s30, 1
      %p127 = scmp.ne.s32.totalorder %s122, %s124
      %p128 = scmp.eq.s32.totalorder %s30, 0
      %p129 = por %p127, %p128
      %p130 = scmp.ne.s32.totalorder %s122, %s124
      %p131 = scmp.eq.s32.totalorder %s35, 1
      %p132 = por %p130, %p131
      %p133 = scmp.ne.s32.totalorder %s124, %s125
      %p134 = scmp.eq.s32.totalorder %s35, 0
      %p135 = por %p133, %p134
      %p136 = scmp.ne.s32.totalorder %s124, %s125
      %p137 = scmp.eq.s32.totalorder %s36, 1
      %p138 = por %p136, %p137
      %p140 = scmp.ne.s32.totalorder %s125, %s139
      %p141 = scmp.eq.s32.totalorder %s36, 0
      %p142 = por %p140, %p141
      %s144 = sadd.s32 %s143, 1
      %p147 = scmp.eq.s32.totalorder %s30, 1
      %p148 = scmp.ne.s32.totalorder %s143, %s145
      %p149 = scmp.eq.s32.totalorder %s30, 0
      %p150 = por %p148, %p149
      %p151 = scmp.ne.s32.totalorder %s143, %s145
      %p152 = scmp.eq.s32.totalorder %s35, 1
      %p153 = por %p151, %p152
      %p154 = scmp.ne.s32.totalorder %s145, %s146
      %p155 = scmp.eq.s32.totalorder %s35, 0
      %p156 = por %p154, %p155
      %p157 = scmp.ne.s32.totalorder %s145, %s146
      %p158 = scmp.eq.s32.totalorder %s36, 1
      %p159 = por %p157, %p158
      %p161 = scmp.ne.s32.totalorder %s146, %s160
      %p162 = scmp.eq.s32.totalorder %s36, 0
      %p163 = por %p161, %p162
      %s165 = sadd.s32 %s164, 1
      %p168 = scmp.eq.s32.totalorder %s30, 1
      %p169 = scmp.ne.s32.totalorder %s164, %s166
      %p170 = scmp.eq.s32.totalorder %s30, 0
      %p171 = por %p169, %p170
      %p172 = scmp.ne.s32.totalorder %s164, %s166
      %p173 = scmp.eq.s32.totalorder %s35, 1
      %p174 = por %p172, %p173
      %p175 = scmp.ne.s32.totalorder %s166, %s167
      %p176 = scmp.eq.s32.totalorder %s35, 0
      %p177 = por %p175, %p176
      %p178 = scmp.ne.s32.totalorder %s166, %s167
      %p179 = scmp.eq.s32.totalorder %s36, 1
      %p180 = por %p178, %p179
      %p182 = scmp.ne.s32.totalorder %s167, %s181
      %p183 = scmp.eq.s32.totalorder %s36, 0
      %p184 = por %p182, %p183
      %s185 = ssub.s32 %s30, %s37
      %p186 = scmp.eq.s32.totalorder %s185, 0
      %s188 = sadd.s32 %s187, 1
      %s189 = scalar_select %p186, %s187, %s188
      %p192 = pneg %p186
      %p193 = scmp.eq.s32.totalorder %s30, 1
      %p194 = por %p192, %p193
      %p195 = scmp.ne.s32.totalorder %s187, %s190
      %p196 = scmp.eq.s32.totalorder %s30, 0
      %p197 = por %p195, %p196
      %p198 = scmp.ne.s32.totalorder %s187, %s190
      %p199 = scmp.eq.s32.totalorder %s35, 1
      %p200 = por %p198, %p199
      %p201 = scmp.ne.s32.totalorder %s190, %s191
      %p202 = scmp.eq.s32.totalorder %s35, 0
      %p203 = por %p201, %p202
      %p204 = scmp.ne.s32.totalorder %s190, %s191
      %p205 = scmp.eq.s32.totalorder %s36, 1
      %p206 = por %p204, %p205
      %p208 = scmp.ne.s32.totalorder %s191, %s207
      %p209 = scmp.eq.s32.totalorder %s36, 0
      %p210 = por %p208, %p209
      %s211 = ssub.s32 %s30, %s37
      %p212 = scmp.eq.s32.totalorder %s211, 0
      %s214 = sadd.s32 %s213, 1
      %s215 = scalar_select %p212, %s213, %s214
      %p218 = pneg %p212
      %p219 = scmp.eq.s32.totalorder %s30, 1
      %p220 = por %p218, %p219
      %p221 = scmp.ne.s32.totalorder %s213, %s216
      %p222 = scmp.eq.s32.totalorder %s30, 0
      %p223 = por %p221, %p222
      %p224 = scmp.ne.s32.totalorder %s213, %s216
      %p225 = scmp.eq.s32.totalorder %s35, 1
      %p226 = por %p224, %p225
      %p227 = scmp.ne.s32.totalorder %s216, %s217
      %p228 = scmp.eq.s32.totalorder %s35, 0
      %p229 = por %p227, %p228
      %p230 = scmp.ne.s32.totalorder %s216, %s217
      %p231 = scmp.eq.s32.totalorder %s36, 1
      %p232 = por %p230, %p231
      %p234 = scmp.ne.s32.totalorder %s217, %s233
      %p235 = scmp.eq.s32.totalorder %s36, 0
      %p236 = por %p234, %p235
      %s237 = ssub.s32 %s30, %s37
      %p238 = scmp.eq.s32.totalorder %s237, 0
      %s240 = sadd.s32 %s239, 1
      %s241 = scalar_select %p238, %s239, %s240
      %p244 = pneg %p238
      %p245 = scmp.eq.s32.totalorder %s30, 1
      %p246 = por %p244, %p245
      %p247 = scmp.ne.s32.totalorder %s239, %s242
      %p248 = scmp.eq.s32.totalorder %s30, 0
      %p249 = por %p247, %p248
      %p250 = scmp.ne.s32.totalorder %s239, %s242
      %p251 = scmp.eq.s32.totalorder %s35, 1
      %p252 = por %p250, %p251
      %p253 = scmp.ne.s32.totalorder %s242, %s243
      %p254 = scmp.eq.s32.totalorder %s35, 0
      %p255 = por %p253, %p254
      %p256 = scmp.ne.s32.totalorder %s242, %s243
      %p257 = scmp.eq.s32.totalorder %s36, 1
      %p258 = por %p256, %p257
      %p260 = scmp.ne.s32.totalorder %s243, %s259
      %p261 = scmp.eq.s32.totalorder %s36, 0
      %p262 = por %p260, %p261
      %s263 = ssub.s32 %s30, %s37
      %p264 = scmp.eq.s32.totalorder %s263, 0
      %s266 = sadd.s32 %s265, 1
      %s267 = scalar_select %p264, %s265, %s266
      %p270 = pneg %p264
      %p271 = scmp.eq.s32.totalorder %s30, 1
      %p272 = por %p270, %p271
      %p273 = scmp.ne.s32.totalorder %s265, %s268
      %p274 = scmp.eq.s32.totalorder %s30, 0
      %p275 = por %p273, %p274
      %p276 = scmp.ne.s32.totalorder %s265, %s268
      %p277 = scmp.eq.s32.totalorder %s35, 1
      %p278 = por %p276, %p277
      %p279 = scmp.ne.s32.totalorder %s268, %s269
      %p280 = scmp.eq.s32.totalorder %s35, 0
      %p281 = por %p279, %p280
      %p282 = scmp.ne.s32.totalorder %s268, %s269
      %p283 = scmp.eq.s32.totalorder %s36, 1
      %p284 = por %p282, %p283
      %p286 = scmp.ne.s32.totalorder %s269, %s285
      %p287 = scmp.eq.s32.totalorder %s36, 0
      %p288 = por %p286, %p287
      %s289 = ssub.s32 %s30, %s37
      %p290 = scmp.eq.s32.totalorder %s289, 0
      %s292 = sadd.s32 %s291, 1
      %s293 = scalar_select %p290, %s291, %s292
      %p296 = pneg %p290
      %p297 = scmp.eq.s32.totalorder %s30, 1
      %p298 = por %p296, %p297
      %p299 = scmp.ne.s32.totalorder %s291, %s294
      %p300 = scmp.eq.s32.totalorder %s30, 0
      %p301 = por %p299, %p300
      %p302 = scmp.ne.s32.totalorder %s291, %s294
      %p303 = scmp.eq.s32.totalorder %s35, 1
      %p304 = por %p302, %p303
      %p305 = scmp.ne.s32.totalorder %s294, %s295
      %p306 = scmp.eq.s32.totalorder %s35, 0
      %p307 = por %p305, %p306
      %p308 = scmp.ne.s32.totalorder %s294, %s295
      %p309 = scmp.eq.s32.totalorder %s36, 1
      %p310 = por %p308, %p309
      %p312 = scmp.ne.s32.totalorder %s295, %s311
      %p313 = scmp.eq.s32.totalorder %s36, 0
      %p314 = por %p312, %p313
      %s315 = ssub.s32 %s30, %s37
      %p316 = scmp.eq.s32.totalorder %s315, 0
      %s318 = sadd.s32 %s317, 1
      %s319 = scalar_select %p316, %s317, %s318
      %p322 = pneg %p316
      %p323 = scmp.eq.s32.totalorder %s30, 1
      %p324 = por %p322, %p323
      %p325 = scmp.ne.s32.totalorder %s317, %s320
      %p326 = scmp.eq.s32.totalorder %s30, 0
      %p327 = por %p325, %p326
      %p328 = scmp.ne.s32.totalorder %s317, %s320
      %p329 = scmp.eq.s32.totalorder %s35, 1
      %p330 = por %p328, %p329
      %p331 = scmp.ne.s32.totalorder %s320, %s321
      %p332 = scmp.eq.s32.totalorder %s35, 0
      %p333 = por %p331, %p332
      %p334 = scmp.ne.s32.totalorder %s320, %s321
      %p335 = scmp.eq.s32.totalorder %s36, 1
      %p336 = por %p334, %p335
      %p338 = scmp.ne.s32.totalorder %s321, %s337
      %p339 = scmp.eq.s32.totalorder %s36, 0
      %p340 = por %p338, %p339
      %p341 = scmp.lt.s32.totalorder %s30, 0
      %s342 = scalar_select %p341, %s30, 0
      %p343 = scmp.lt.s32.totalorder %s37, 0
      %s344 = scalar_select %p343, %s37, 0
      %s345 = ssub.s32 %s342, %s344
      %p346 = scmp.eq.s32.totalorder %s345, 0
      %s348 = sadd.s32 %s347, 1
      %s349 = scalar_select %p346, %s347, %s348
      %p352 = pneg %p346
      %p353 = scmp.eq.s32.totalorder %s30, 1
      %p354 = por %p352, %p353
      %p355 = scmp.ne.s32.totalorder %s347, %s350
      %p356 = scmp.eq.s32.totalorder %s30, 0
      %p357 = por %p355, %p356
      %p358 = scmp.ne.s32.totalorder %s347, %s350
      %p359 = scmp.eq.s32.totalorder %s35, 1
      %p360 = por %p358, %p359
      %p361 = scmp.ne.s32.totalorder %s350, %s351
      %p362 = scmp.eq.s32.totalorder %s35, 0
      %p363 = por %p361, %p362
      %p364 = scmp.ne.s32.totalorder %s350, %s351
      %p365 = scmp.eq.s32.totalorder %s36, 1
      %p366 = por %p364, %p365
      %p368 = scmp.ne.s32.totalorder %s351, %s367
      %p369 = scmp.eq.s32.totalorder %s36, 0
      %p370 = por %p368, %p369
      %p371 = scmp.lt.s32.totalorder %s30, 0
      %s372 = scalar_select %p371, %s30, 0
      %p373 = scmp.lt.s32.totalorder %s37, 0
      %s374 = scalar_select %p373, %s37, 0
      %s375 = ssub.s32 %s372, %s374
      %p376 = scmp.eq.s32.totalorder %s375, 0
      %s378 = sadd.s32 %s377, 1
      %s379 = scalar_select %p376, %s377, %s378
      %p382 = pneg %p376
      %p383 = scmp.eq.s32.totalorder %s30, 1
      %p384 = por %p382, %p383
      %p385 = scmp.ne.s32.totalorder %s377, %s380
      %p386 = scmp.eq.s32.totalorder %s30, 0
      %p387 = por %p385, %p386
      %p388 = scmp.ne.s32.totalorder %s377, %s380
      %p389 = scmp.eq.s32.totalorder %s35, 1
      %p390 = por %p388, %p389
      %p391 = scmp.ne.s32.totalorder %s380, %s381
      %p392 = scmp.eq.s32.totalorder %s35, 0
      %p393 = por %p391, %p392
      %p394 = scmp.ne.s32.totalorder %s380, %s381
      %p395 = scmp.eq.s32.totalorder %s36, 1
      %p396 = por %p394, %p395
      %p398 = scmp.ne.s32.totalorder %s381, %s397
      %p399 = scmp.eq.s32.totalorder %s36, 0
      %p400 = por %p398, %p399
      %p401 = scmp.lt.s32.totalorder %s30, 0
      %s402 = scalar_select %p401, %s30, 0
      %p403 = scmp.lt.s32.totalorder %s37, 0
      %s404 = scalar_select %p403, %s37, 0
      %s405 = ssub.s32 %s402, %s404
      %p406 = scmp.eq.s32.totalorder %s405, 0
      %s408 = sadd.s32 %s407, 1
      %s409 = scalar_select %p406, %s407, %s408
      %p412 = pneg %p406
      %p413 = scmp.eq.s32.totalorder %s30, 1
      %p414 = por %p412, %p413
      %p415 = scmp.ne.s32.totalorder %s407, %s410
      %p416 = scmp.eq.s32.totalorder %s30, 0
      %p417 = por %p415, %p416
      %p418 = scmp.ne.s32.totalorder %s407, %s410
      %p419 = scmp.eq.s32.totalorder %s35, 1
      %p420 = por %p418, %p419
      %p421 = scmp.ne.s32.totalorder %s410, %s411
      %p422 = scmp.eq.s32.totalorder %s35, 0
      %p423 = por %p421, %p422
      %p424 = scmp.ne.s32.totalorder %s410, %s411
      %p425 = scmp.eq.s32.totalorder %s36, 1
      %p426 = por %p424, %p425
      %p428 = scmp.ne.s32.totalorder %s411, %s427
      %p429 = scmp.eq.s32.totalorder %s36, 0
      %p430 = por %p428, %p429
      %p431 = scmp.lt.s32.totalorder %s30, 0
      %s432 = scalar_select %p431, %s30, 0
      %p433 = scmp.lt.s32.totalorder %s37, 0
      %s434 = scalar_select %p433, %s37, 0
      %s435 = ssub.s32 %s432, %s434
      %p436 = scmp.eq.s32.totalorder %s435, 0
      %s438 = sadd.s32 %s437, 1
      %s439 = scalar_select %p436, %s437, %s438
      %p442 = pneg %p436
      %p443 = scmp.eq.s32.totalorder %s30, 1
      %p444 = por %p442, %p443
      %p445 = scmp.ne.s32.totalorder %s437, %s440
      %p446 = scmp.eq.s32.totalorder %s30, 0
      %p447 = por %p445, %p446
      %p448 = scmp.ne.s32.totalorder %s437, %s440
      %p449 = scmp.eq.s32.totalorder %s35, 1
      %p450 = por %p448, %p449
      %p451 = scmp.ne.s32.totalorder %s440, %s441
      %p452 = scmp.eq.s32.totalorder %s35, 0
      %p453 = por %p451, %p452
      %p454 = scmp.ne.s32.totalorder %s440, %s441
      %p455 = scmp.eq.s32.totalorder %s36, 1
      %p456 = por %p454, %p455
      %p458 = scmp.ne.s32.totalorder %s441, %s457
      %p459 = scmp.eq.s32.totalorder %s36, 0
      %p460 = por %p458, %p459
      %s462 = sadd.s32 %s461, 1
      %p465 = scmp.eq.s32.totalorder %s30, 1
      %p466 = scmp.ne.s32.totalorder %s461, %s463
      %p467 = scmp.eq.s32.totalorder %s30, 0
      %p468 = por %p466, %p467
      %p469 = scmp.ne.s32.totalorder %s461, %s463
      %p470 = scmp.eq.s32.totalorder %s35, 1
      %p471 = por %p469, %p470
      %p472 = scmp.ne.s32.totalorder %s463, %s464
      %p473 = scmp.eq.s32.totalorder %s35, 0
      %p474 = por %p472, %p473
      %p475 = scmp.ne.s32.totalorder %s463, %s464
      %p476 = scmp.eq.s32.totalorder %s36, 1
      %p477 = por %p475, %p476
      %p479 = scmp.ne.s32.totalorder %s464, %s478
      %p480 = scmp.eq.s32.totalorder %s36, 0
      %p481 = por %p479, %p480
      %s483 = sadd.s32 %s482, 1
      %p486 = scmp.eq.s32.totalorder %s30, 1
      %p487 = scmp.ne.s32.totalorder %s482, %s484
      %p488 = scmp.eq.s32.totalorder %s30, 0
      %p489 = por %p487, %p488
      %p490 = scmp.ne.s32.totalorder %s482, %s484
      %p491 = scmp.eq.s32.totalorder %s35, 1
      %p492 = por %p490, %p491
      %p493 = scmp.ne.s32.totalorder %s484, %s485
      %p494 = scmp.eq.s32.totalorder %s35, 0
      %p495 = por %p493, %p494
      %p496 = scmp.ne.s32.totalorder %s484, %s485
      %p497 = scmp.eq.s32.totalorder %s36, 1
      %p498 = por %p496, %p497
      %p500 = scmp.ne.s32.totalorder %s485, %s499
      %p501 = scmp.eq.s32.totalorder %s36, 0
      %p502 = por %p500, %p501
      %p503 = scmp.le.s32.totalorder 1, %s30
      %p504 = scmp.lt.s32.totalorder %s30, 3
      %p505 = pnand %p503, %p504
      %p506 = pneg %p505
      // Predicated region
      $region9: #{tpu_custom_call.1} parent=5 // pred_check
        _
      $region10: #{tpu_custom_call.1} parent=5 // pred_check_branch
        %508 = sbr.rel (%p505) target = $region12
      $region11: #{tpu_custom_call.1} parent=5 // pred_region
        %s509 = ssub.s32 %s30, 1
        // Predicated region
        $region13: #{tpu_custom_call.1} parent=11 // pred_check
          %p510 = pneg %p51
        $region14: #{tpu_custom_call.1} parent=11 // pred_check_branch
          %512 = sbr.rel (%p510) target = $region16
        $region15: #{tpu_custom_call.1} parent=11 // pred_region
          _
        $region16: #{tpu_custom_call.1} parent=11 // pred_fallthru
          _
        // Predicated region
        $region17: #{tpu_custom_call.1} parent=11 // pred_check
          %p513 = pneg %p72
        $region18: #{tpu_custom_call.1} parent=11 // pred_check_branch
          %515 = sbr.rel (%p513) target = $region20
        $region19: #{tpu_custom_call.1} parent=11 // pred_region
          %s517 = ssub.s32 16, 16
          %518 = vsyncadd [#allocation9], %s517
          %s520 = sshll.u32 [#allocation8], 4
          %s521 = int_to_ptr.vmem [resolvable:$true] %s520
          %523 = dma.hbm_to_vmem [thread:$0]  %s1, 16, %s521, [#allocation9]
        $region20: #{tpu_custom_call.1} parent=11 // pred_fallthru
          _
        // Predicated region
        $region21: #{tpu_custom_call.1} parent=11 // pred_check
          %p524 = pneg %p93
        $region22: #{tpu_custom_call.1} parent=11 // pred_check_branch
          %526 = sbr.rel (%p524) target = $region24
        $region23: #{tpu_custom_call.1} parent=11 // pred_region
          _
        $region24: #{tpu_custom_call.1} parent=11 // pred_fallthru
          _
        // Predicated region
        $region25: #{tpu_custom_call.1} parent=11 // pred_check
          %p527 = pneg %p114
        $region26: #{tpu_custom_call.1} parent=11 // pred_check_branch
          %529 = sbr.rel (%p527) target = $region28
        $region27: #{tpu_custom_call.1} parent=11 // pred_region
          %s531 = ssub.s32 16, 16
          %532 = vsyncadd [#allocation12], %s531
          %s534 = sshll.u32 [#allocation11], 4
          %s535 = int_to_ptr.vmem [resolvable:$true] %s534
          %537 = dma.hbm_to_vmem [thread:$0]  %s3, 16, %s535, [#allocation12]
        $region28: #{tpu_custom_call.1} parent=11 // pred_fallthru
          _
        // Predicated region
        $region29: #{tpu_custom_call.1} parent=11 // pred_check
          %p538 = pneg %p135
        $region30: #{tpu_custom_call.1} parent=11 // pred_check_branch
          %540 = sbr.rel (%p538) target = $region32
        $region31: #{tpu_custom_call.1} parent=11 // pred_region
          _
        $region32: #{tpu_custom_call.1} parent=11 // pred_fallthru
          _
        // Predicated region
        $region33: #{tpu_custom_call.1} parent=11 // pred_check
          %p541 = pneg %p156
        $region34: #{tpu_custom_call.1} parent=11 // pred_check_branch
          %543 = sbr.rel (%p541) target = $region36
        $region35: #{tpu_custom_call.1} parent=11 // pred_region
          %s545 = ssub.s32 256, 256
          %546 = vsyncadd [#allocation12], %s545
          %s547 = sshll.u32 [#allocation13], 4
          %s548 = int_to_ptr.vmem [resolvable:$true] %s547
          %553 = dma.hbm_to_vmem [thread:$0]  %s5, 256, %s548, [#allocation12], 128, 128, 8
        $region36: #{tpu_custom_call.1} parent=11 // pred_fallthru
          _
        // Predicated region
        $region37: #{tpu_custom_call.1} parent=11 // pred_check
          %p554 = pneg %p177
        $region38: #{tpu_custom_call.1} parent=11 // pred_check_branch
          %556 = sbr.rel (%p554) target = $region40
        $region39: #{tpu_custom_call.1} parent=11 // pred_region
          %s558 = ssub.s32 16, 16
          %559 = vsyncadd [#allocation15], %s558
          %s561 = sshll.u32 [#allocation14], 4
          %s562 = int_to_ptr.vmem [resolvable:$true] %s561
          %564 = dma.hbm_to_vmem [thread:$0]  %s6, 16, %s562, [#allocation15]
        $region40: #{tpu_custom_call.1} parent=11 // pred_fallthru
          _
      $region12: #{tpu_custom_call.1} parent=5 // pred_fallthru
        _
      %p565 = scmp.lt.s32.totalorder %s30, 2
      // Predicated region
      $region41: #{tpu_custom_call.1} parent=5 // pred_check
        %p566 = pneg %p565
      $region42: #{tpu_custom_call.1} parent=5 // pred_check_branch
        %568 = sbr.rel (%p566) target = $region44
      $region43: #{tpu_custom_call.1} parent=5 // pred_region
        // Predicated region
        $region45: #{tpu_custom_call.1} parent=43 // pred_check
          %p569 = pneg %p197
        $region46: #{tpu_custom_call.1} parent=43 // pred_check_branch
          %571 = sbr.rel (%p569) target = $region48
        $region47: #{tpu_custom_call.1} parent=43 // pred_region
          %s572 = sand.u32 %s30, 1
          %s573 = scalar_lea.sflag [#allocation9], %s572
          %s574 = sand.u32 %s187, 1
          %s575 = scalar_lea.vmem [#allocation16], %s574
          %s577 = ssub.s32 16, 16
          %578 = vsyncadd %s573, %s577
          %s579 = smul.addr %s30, 16
          %s580 = scalar_lea.hbm %s7, %s579
          %s582 = sshll.u32 %s575, 4
          %s583 = int_to_ptr.vmem [resolvable:$true] %s582
          %585 = dma.hbm_to_vmem [thread:$0]  %s580, 16, %s583, %s573
        $region48: #{tpu_custom_call.1} parent=43 // pred_fallthru
          _
        // Predicated region
        $region49: #{tpu_custom_call.1} parent=43 // pred_check
          %p586 = pneg %p223
        $region50: #{tpu_custom_call.1} parent=43 // pred_check_branch
          %588 = sbr.rel (%p586) target = $region52
        $region51: #{tpu_custom_call.1} parent=43 // pred_region
          %s589 = sand.u32 %s30, 1
          %s590 = scalar_lea.sflag [#allocation9], %s589
          %s591 = sand.u32 %s213, 1
          %s592 = smul.addr %s591, 64
          %s593 = scalar_lea.vmem [#allocation17], %s592
          %s595 = ssub.s32 1024, 1024
          %596 = vsyncadd %s590, %s595
          %s597 = smul.addr %s30, 16
          %s598 = smul.addr %s597, 64
          %s599 = scalar_lea.hbm %s8, %s598
          %s600 = sshll.u32 %s593, 4
          %s601 = int_to_ptr.vmem [resolvable:$true] %s600
          %606 = dma.hbm_to_vmem [thread:$0]  %s599, 1024, %s601, %s590, 64, 64, 4
        $region52: #{tpu_custom_call.1} parent=43 // pred_fallthru
          _
        // Predicated region
        $region53: #{tpu_custom_call.1} parent=43 // pred_check
          %p607 = pneg %p249
        $region54: #{tpu_custom_call.1} parent=43 // pred_check_branch
          %609 = sbr.rel (%p607) target = $region56
        $region55: #{tpu_custom_call.1} parent=43 // pred_region
          %s610 = sand.u32 %s30, 1
          %s611 = scalar_lea.sflag [#allocation9], %s610
          %s612 = sand.u32 %s239, 1
          %s613 = smul.addr %s612, 64
          %s614 = scalar_lea.vmem [#allocation18], %s613
          %s616 = ssub.s32 1024, 1024
          %617 = vsyncadd %s611, %s616
          %s618 = smul.addr %s30, 16
          %s619 = smul.addr %s618, 64
          %s620 = scalar_lea.hbm %s9, %s619
          %s621 = sshll.u32 %s614, 4
          %s622 = int_to_ptr.vmem [resolvable:$true] %s621
          %627 = dma.hbm_to_vmem [thread:$0]  %s620, 1024, %s622, %s611, 64, 64, 4
        $region56: #{tpu_custom_call.1} parent=43 // pred_fallthru
          _
        // Predicated region
        $region57: #{tpu_custom_call.1} parent=43 // pred_check
          %p628 = pneg %p275
        $region58: #{tpu_custom_call.1} parent=43 // pred_check_branch
          %630 = sbr.rel (%p628) target = $region60
        $region59: #{tpu_custom_call.1} parent=43 // pred_region
          %s631 = sand.u32 %s30, 1
          %s632 = scalar_lea.sflag [#allocation9], %s631
          %s633 = sand.u32 %s265, 1
          %s634 = scalar_lea.vmem [#allocation19], %s633
          %s636 = ssub.s32 16, 16
          %637 = vsyncadd %s632, %s636
          %s638 = smul.addr %s30, 16
          %s639 = scalar_lea.hbm %s10, %s638
          %s641 = sshll.u32 %s634, 4
          %s642 = int_to_ptr.vmem [resolvable:$true] %s641
          %644 = dma.hbm_to_vmem [thread:$0]  %s639, 16, %s642, %s632
        $region60: #{tpu_custom_call.1} parent=43 // pred_fallthru
          _
        // Predicated region
        $region61: #{tpu_custom_call.1} parent=43 // pred_check
          %p645 = pneg %p301
        $region62: #{tpu_custom_call.1} parent=43 // pred_check_branch
          %647 = sbr.rel (%p645) target = $region64
        $region63: #{tpu_custom_call.1} parent=43 // pred_region
          %s648 = sand.u32 %s30, 1
          %s649 = scalar_lea.sflag [#allocation9], %s648
          %s650 = sand.u32 %s291, 1
          %s651 = smul.addr %s650, 64
          %s652 = scalar_lea.vmem [#allocation20], %s651
          %s654 = ssub.s32 1024, 1024
          %655 = vsyncadd %s649, %s654
          %s656 = smul.addr %s30, 16
          %s657 = smul.addr %s656, 64
          %s658 = scalar_lea.hbm %s11, %s657
          %s659 = sshll.u32 %s652, 4
          %s660 = int_to_ptr.vmem [resolvable:$true] %s659
          %665 = dma.hbm_to_vmem [thread:$0]  %s658, 1024, %s660, %s649, 64, 64, 4
        $region64: #{tpu_custom_call.1} parent=43 // pred_fallthru
          _
        // Predicated region
        $region65: #{tpu_custom_call.1} parent=43 // pred_check
          %p666 = pneg %p327
        $region66: #{tpu_custom_call.1} parent=43 // pred_check_branch
          %668 = sbr.rel (%p666) target = $region68
        $region67: #{tpu_custom_call.1} parent=43 // pred_region
          %s669 = sand.u32 %s30, 1
          %s670 = scalar_lea.sflag [#allocation9], %s669
          %s671 = sand.u32 %s317, 1
          %s672 = scalar_lea.vmem [#allocation21], %s671
          %s674 = ssub.s32 16, 16
          %675 = vsyncadd %s670, %s674
          %s676 = smul.addr %s30, 16
          %s677 = scalar_lea.hbm %s12, %s676
          %s679 = sshll.u32 %s672, 4
          %s680 = int_to_ptr.vmem [resolvable:$true] %s679
          %682 = dma.hbm_to_vmem [thread:$0]  %s677, 16, %s680, %s670
        $region68: #{tpu_custom_call.1} parent=43 // pred_fallthru
          _
        // Predicated region
        $region69: #{tpu_custom_call.1} parent=43 // pred_check
          %p683 = pneg %p357
        $region70: #{tpu_custom_call.1} parent=43 // pred_check_branch
          %685 = sbr.rel (%p683) target = $region72
        $region71: #{tpu_custom_call.1} parent=43 // pred_region
          %p686 = scmp.lt.s32.totalorder %s30, 0
          %s687 = scalar_select %p686, %s30, 0
          %p688 = scmp.lt.s32.totalorder %s687, 0
          %s689 = scalar_select %p688, %s687, 0
          %s690 = smul.addr %s689, 16
          %s691 = smul.addr %s690, 4
          %s692 = scalar_lea.vmem %s13, %s691
          %p693 = scmp.lt.s32.totalorder %s30, 0
          %s694 = scalar_select %p693, %s30, 0
        $region72: #{tpu_custom_call.1} parent=43 // pred_fallthru
          _
        // Predicated region
        $region73: #{tpu_custom_call.1} parent=43 // pred_check
          %p695 = pneg %p387
        $region74: #{tpu_custom_call.1} parent=43 // pred_check_branch
          %697 = sbr.rel (%p695) target = $region76
        $region75: #{tpu_custom_call.1} parent=43 // pred_region
          %p698 = scmp.lt.s32.totalorder %s30, 0
          %s699 = scalar_select %p698, %s30, 0
          %p700 = scmp.lt.s32.totalorder %s699, 0
          %s701 = scalar_select %p700, %s699, 0
          %s702 = scalar_lea.vmem %s14, %s701
          %p703 = scmp.lt.s32.totalorder %s30, 0
          %s704 = scalar_select %p703, %s30, 0
        $region76: #{tpu_custom_call.1} parent=43 // pred_fallthru
          _
        // Predicated region
        $region77: #{tpu_custom_call.1} parent=43 // pred_check
          %p705 = pneg %p417
        $region78: #{tpu_custom_call.1} parent=43 // pred_check_branch
          %707 = sbr.rel (%p705) target = $region80
        $region79: #{tpu_custom_call.1} parent=43 // pred_region
          %p708 = scmp.lt.s32.totalorder %s30, 0
          %s709 = scalar_select %p708, %s30, 0
          %p710 = scmp.lt.s32.totalorder %s709, 0
          %s711 = scalar_select %p710, %s709, 0
          %s712 = smul.addr %s711, 16
          %s713 = smul.addr %s712, 4
          %s714 = scalar_lea.vmem %s15, %s713
          %p715 = scmp.lt.s32.totalorder %s30, 0
          %s716 = scalar_select %p715, %s30, 0
        $region80: #{tpu_custom_call.1} parent=43 // pred_fallthru
          _
        // Predicated region
        $region81: #{tpu_custom_call.1} parent=43 // pred_check
          %p717 = pneg %p447
        $region82: #{tpu_custom_call.1} parent=43 // pred_check_branch
          %719 = sbr.rel (%p717) target = $region84
        $region83: #{tpu_custom_call.1} parent=43 // pred_region
          %p720 = scmp.lt.s32.totalorder %s30, 0
          %s721 = scalar_select %p720, %s30, 0
          %p722 = scmp.lt.s32.totalorder %s721, 0
          %s723 = scalar_select %p722, %s721, 0
          %s724 = scalar_lea.vmem %s16, %s723
          %p725 = scmp.lt.s32.totalorder %s30, 0
          %s726 = scalar_select %p725, %s30, 0
        $region84: #{tpu_custom_call.1} parent=43 // pred_fallthru
          _
      $region44: #{tpu_custom_call.1} parent=5 // pred_fallthru
        _
      %p727 = scmp.le.s32.totalorder 1, %s30
      %p728 = scmp.lt.s32.totalorder %s30, 3
      %p729 = pnand %p727, %p728
      %p730 = pneg %p729
      // Predicated region
      $region85: #{tpu_custom_call.1} parent=5 // pred_check
        _
      $region86: #{tpu_custom_call.1} parent=5 // pred_check_branch
        %732 = sbr.rel (%p729) target = $region88
      $region87: #{tpu_custom_call.1} parent=5 // pred_region
        %s733 = ssub.s32 %s30, 1
        // Predicated region
        $region89: #{tpu_custom_call.1} parent=87 // pred_check
          %p734 = pneg %p72
        $region90: #{tpu_custom_call.1} parent=87 // pred_check_branch
          %736 = sbr.rel (%p734) target = $region92
        $region91: #{tpu_custom_call.1} parent=87 // pred_region
          %737 = dma.done [#allocation9], 16
        $region92: #{tpu_custom_call.1} parent=87 // pred_fallthru
          _
        // Predicated region
        $region93: #{tpu_custom_call.1} parent=87 // pred_check
          %p738 = pneg %p114
        $region94: #{tpu_custom_call.1} parent=87 // pred_check_branch
          %740 = sbr.rel (%p738) target = $region96
        $region95: #{tpu_custom_call.1} parent=87 // pred_region
          %741 = dma.done [#allocation12], 16
        $region96: #{tpu_custom_call.1} parent=87 // pred_fallthru
          _
        // Predicated region
        $region97: #{tpu_custom_call.1} parent=87 // pred_check
          %p742 = pneg %p156
        $region98: #{tpu_custom_call.1} parent=87 // pred_check_branch
          %744 = sbr.rel (%p742) target = $region100
        $region99: #{tpu_custom_call.1} parent=87 // pred_region
          %745 = dma.done [#allocation12], 256
        $region100: #{tpu_custom_call.1} parent=87 // pred_fallthru
          _
        // Predicated region
        $region101: #{tpu_custom_call.1} parent=87 // pred_check
          %p746 = pneg %p177
        $region102: #{tpu_custom_call.1} parent=87 // pred_check_branch
          %748 = sbr.rel (%p746) target = $region104
        $region103: #{tpu_custom_call.1} parent=87 // pred_region
          %749 = dma.done [#allocation15], 16
        $region104: #{tpu_custom_call.1} parent=87 // pred_fallthru
          _
        %s750 = sand.u32 %s35, 1
        %s751 = scalar_lea.sflag [#allocation9], %s750
        %s752 = sand.u32 %s190, 1
        %s753 = scalar_lea.vmem [#allocation16], %s752
        // Predicated region
        $region105: #{tpu_custom_call.1} parent=87 // pred_check
          %p754 = pneg %p203
        $region106: #{tpu_custom_call.1} parent=87 // pred_check_branch
          %756 = sbr.rel (%p754) target = $region108
        $region107: #{tpu_custom_call.1} parent=87 // pred_region
          %757 = dma.done %s751, 16
        $region108: #{tpu_custom_call.1} parent=87 // pred_fallthru
          _
        %s758 = sand.u32 %s35, 1
        %s759 = scalar_lea.sflag [#allocation9], %s758
        %s760 = sand.u32 %s216, 1
        %s761 = smul.addr %s760, 64
        %s762 = scalar_lea.vmem [#allocation17], %s761
        // Predicated region
        $region109: #{tpu_custom_call.1} parent=87 // pred_check
          %p763 = pneg %p229
        $region110: #{tpu_custom_call.1} parent=87 // pred_check_branch
          %765 = sbr.rel (%p763) target = $region112
        $region111: #{tpu_custom_call.1} parent=87 // pred_region
          %766 = dma.done %s759, 1024
        $region112: #{tpu_custom_call.1} parent=87 // pred_fallthru
          _
        %s767 = sand.u32 %s35, 1
        %s768 = scalar_lea.sflag [#allocation9], %s767
        %s769 = sand.u32 %s242, 1
        %s770 = smul.addr %s769, 64
        %s771 = scalar_lea.vmem [#allocation18], %s770
        // Predicated region
        $region113: #{tpu_custom_call.1} parent=87 // pred_check
          %p772 = pneg %p255
        $region114: #{tpu_custom_call.1} parent=87 // pred_check_branch
          %774 = sbr.rel (%p772) target = $region116
        $region115: #{tpu_custom_call.1} parent=87 // pred_region
          %775 = dma.done %s768, 1024
        $region116: #{tpu_custom_call.1} parent=87 // pred_fallthru
          _
        %s776 = sand.u32 %s35, 1
        %s777 = scalar_lea.sflag [#allocation9], %s776
        %s778 = sand.u32 %s268, 1
        %s779 = scalar_lea.vmem [#allocation19], %s778
        // Predicated region
        $region117: #{tpu_custom_call.1} parent=87 // pred_check
          %p780 = pneg %p281
        $region118: #{tpu_custom_call.1} parent=87 // pred_check_branch
          %782 = sbr.rel (%p780) target = $region120
        $region119: #{tpu_custom_call.1} parent=87 // pred_region
          %783 = dma.done %s777, 16
        $region120: #{tpu_custom_call.1} parent=87 // pred_fallthru
          _
        %s784 = sand.u32 %s35, 1
        %s785 = scalar_lea.sflag [#allocation9], %s784
        %s786 = sand.u32 %s294, 1
        %s787 = smul.addr %s786, 64
        %s788 = scalar_lea.vmem [#allocation20], %s787
        // Predicated region
        $region121: #{tpu_custom_call.1} parent=87 // pred_check
          %p789 = pneg %p307
        $region122: #{tpu_custom_call.1} parent=87 // pred_check_branch
          %791 = sbr.rel (%p789) target = $region124
        $region123: #{tpu_custom_call.1} parent=87 // pred_region
          %792 = dma.done %s785, 1024
        $region124: #{tpu_custom_call.1} parent=87 // pred_fallthru
          _
        %s793 = sand.u32 %s35, 1
        %s794 = scalar_lea.sflag [#allocation9], %s793
        %s795 = sand.u32 %s320, 1
        %s796 = scalar_lea.vmem [#allocation21], %s795
        // Predicated region
        $region125: #{tpu_custom_call.1} parent=87 // pred_check
          %p797 = pneg %p333
        $region126: #{tpu_custom_call.1} parent=87 // pred_check_branch
          %799 = sbr.rel (%p797) target = $region128
        $region127: #{tpu_custom_call.1} parent=87 // pred_region
          %800 = dma.done %s794, 16
        $region128: #{tpu_custom_call.1} parent=87 // pred_fallthru
          _
        %p801 = pneg %p51
        %p802 = pneg %p48
        %p803 = pneg %p72
        %p804 = pneg %p69
        %p805 = pneg %p93
        %p806 = pneg %p90
        %p807 = pneg %p114
        %p808 = pneg %p111
        %p809 = pneg %p135
        %p810 = pneg %p132
        %p811 = pneg %p156
        %p812 = pneg %p153
        %p813 = pneg %p177
        %p814 = pneg %p174
        %s815 = sand.u32 %s35, 1
        %s816 = scalar_lea.sflag [#allocation9], %s815
        %s817 = sand.u32 %s190, 1
        %s818 = scalar_lea.vmem [#allocation16], %s817
        %p819 = pneg %p203
        %p820 = pneg %p200
        %s821 = sand.u32 %s35, 1
        %s822 = scalar_lea.sflag [#allocation9], %s821
        %s823 = sand.u32 %s216, 1
        %s824 = smul.addr %s823, 64
        %s825 = scalar_lea.vmem [#allocation17], %s824
        %p826 = pneg %p229
        %p827 = pneg %p226
        %s828 = sand.u32 %s35, 1
        %s829 = scalar_lea.sflag [#allocation9], %s828
        %s830 = sand.u32 %s242, 1
        %s831 = smul.addr %s830, 64
        %s832 = scalar_lea.vmem [#allocation18], %s831
        %p833 = pneg %p255
        %p834 = pneg %p252
        %s835 = sand.u32 %s35, 1
        %s836 = scalar_lea.sflag [#allocation9], %s835
        %s837 = sand.u32 %s268, 1
        %s838 = scalar_lea.vmem [#allocation19], %s837
        %p839 = pneg %p281
        %p840 = pneg %p278
        %s841 = sand.u32 %s35, 1
        %s842 = scalar_lea.sflag [#allocation9], %s841
        %s843 = sand.u32 %s294, 1
        %s844 = smul.addr %s843, 64
        %s845 = scalar_lea.vmem [#allocation20], %s844
        %p846 = pneg %p307
        %p847 = pneg %p304
        %s848 = sand.u32 %s35, 1
        %s849 = scalar_lea.sflag [#allocation9], %s848
        %s850 = sand.u32 %s320, 1
        %s851 = scalar_lea.vmem [#allocation21], %s850
        %p852 = pneg %p333
        %p853 = pneg %p330
        %p854 = scmp.lt.s32.totalorder %s35, 0
        %s855 = scalar_select %p854, %s35, 0
        %p856 = scmp.lt.s32.totalorder %s855, 0
        %s857 = scalar_select %p856, %s855, 0
        %s858 = smul.addr %s857, 16
        %s859 = smul.addr %s858, 4
        %s860 = scalar_lea.vmem %s13, %s859
        %p861 = pneg %p363
        %p862 = pneg %p360
        %p863 = scmp.lt.s32.totalorder %s35, 0
        %s864 = scalar_select %p863, %s35, 0
        %p865 = scmp.lt.s32.totalorder %s864, 0
        %s866 = scalar_select %p865, %s864, 0
        %s867 = scalar_lea.vmem %s14, %s866
        %p868 = pneg %p393
        %p869 = pneg %p390
        %p870 = scmp.lt.s32.totalorder %s35, 0
        %s871 = scalar_select %p870, %s35, 0
        %p872 = scmp.lt.s32.totalorder %s871, 0
        %s873 = scalar_select %p872, %s871, 0
        %s874 = smul.addr %s873, 16
        %s875 = smul.addr %s874, 4
        %s876 = scalar_lea.vmem %s15, %s875
        %p877 = pneg %p423
        %p878 = pneg %p420
        %p879 = scmp.lt.s32.totalorder %s35, 0
        %s880 = scalar_select %p879, %s35, 0
        %p881 = scmp.lt.s32.totalorder %s880, 0
        %s882 = scalar_select %p881, %s880, 0
        %s883 = scalar_lea.vmem %s16, %s882
        %p884 = pneg %p453
        %p885 = pneg %p450
        %p886 = pneg %p474
        %p887 = pneg %p471
        %p888 = pneg %p495
        %p889 = pneg %p492
        %p890 = scmp.lt.s32.totalorder %s35, 0
        %s891 = scalar_select %p890, %s35, 0
        %p892 = scmp.lt.s32.totalorder %s891, 0
        %s893 = scalar_select %p892, %s891, 0
        %s894 = smul.addr %s893, 16
        %s895 = smul.addr %s894, 4
        %s896 = scalar_lea.vmem %s13, %s895
        %p897 = scmp.lt.s32.totalorder %s35, 0
        %s898 = scalar_select %p897, %s35, 0
        %p899 = scmp.lt.s32.totalorder %s35, 0
        %s900 = scalar_select %p899, %s35, 0
        %p901 = scmp.lt.s32.totalorder %s900, 0
        %s902 = scalar_select %p901, %s900, 0
        %s903 = scalar_lea.vmem %s14, %s902
        %p904 = scmp.lt.s32.totalorder %s35, 0
        %s905 = scalar_select %p904, %s35, 0
        %p906 = scmp.lt.s32.totalorder %s35, 0
        %s907 = scalar_select %p906, %s35, 0
        %p908 = scmp.lt.s32.totalorder %s907, 0
        %s909 = scalar_select %p908, %s907, 0
        %s910 = smul.addr %s909, 16
        %s911 = smul.addr %s910, 4
        %s912 = scalar_lea.vmem %s15, %s911
        %p913 = scmp.lt.s32.totalorder %s35, 0
        %s914 = scalar_select %p913, %s35, 0
        %p915 = scmp.lt.s32.totalorder %s35, 0
        %s916 = scalar_select %p915, %s35, 0
        %p917 = scmp.lt.s32.totalorder %s916, 0
        %s918 = scalar_select %p917, %s916, 0
        %s919 = scalar_lea.vmem %s16, %s918
        %p920 = scmp.lt.s32.totalorder %s35, 0
        %s921 = scalar_select %p920, %s35, 0
        %p923 = scmp.eq.s32.totalorder %s35, 0
        // Predicated region
        $region129: #{tpu_custom_call.1} parent=87 // pred_check
          %p924 = pneg %p923
        $region130: #{tpu_custom_call.1} parent=87 // pred_check_branch
          %926 = sbr.rel (%p924) target = $region132
        $region131: #{tpu_custom_call.1} parent=87 // pred_region
          %v927 = vld [vmem:[#allocation13] sm:$0xff]
          %v928 = vld [vmem:[#allocation13 + $0x8] sm:$0xff]
          %929 = vst [vmem:[#allocation22] sm:$0xff] %v927
          %930 = vst [vmem:[#allocation22 + $0x8] sm:$0xff] %v928
          %v931 = vld [vmem:[#allocation14] sm:$0x1]
          %v933 = vlaneseq
          %v934 = vshrl.u32 %v933, 7
          %v935 = vsub.s32 0, %v934
          %v936 = vrot.slane %v931, %v935
          %938 = vst [vmem:[#allocation2] sm:$0xff] %v936
          %v939 = vlaneseq
          %v940 = vand.u32 %v939, 127
          %v941 = vld [vmem:[%s2] sm:$0xff]
          %v942 = vld [vmem:[%s2 + $0x8] sm:$0xff]
          %943 = vset.pattern.permute.xlu0 0
          %944 = vperm.xlu0 %943, %v941
          %v945 = vpop.permute.xlu0 %944
          %946 = vset.pattern.permute.xlu0 0
          %947 = vperm.xlu0 %946, %v942
          %v948 = vpop.permute.xlu0 %947
          %vm949 = vcmp.eq.s32.totalorder %v940, %v945
          %vm950 = vcmp.eq.s32.totalorder %v940, %v948
          %v951 = vsel %vm949, 1, 0
          %v952 = vsel %vm950, 1, 0
          %v953 = vcvt.s32.f32 %v951
          %v954 = vcvt.s32.f32 %v952
          %v955 = vpack.c.bf16 %v954, %v953
          %vm956 = vcmask 64512
          %957 = vst.msk [vmem:[#allocation3] sm:$0xff] %vm956, %v955
          %v958 = vlaneseq
          %v959 = vshrl.u32 %v958, 7
          %v960 = vld [vmem:[#allocation11] sm:$0x1]
          %v961 = vlaneseq
          %v962 = vshrl.u32 %v961, 7
          %v963 = vsub.s32 0, %v962
          %v964 = vrot.slane %v960, %v963
          %vm965 = vcmp.eq.s32.totalorder %v959, %v964
          %v966 = vsel %vm965, 1, 0
          %v967 = vcvt.s32.f32 %v966
          %v968 = vpack.c.bf16 %v967, %v967
          %vm969 = vcmask 125952
          %970 = vst.msk [vmem:[#allocation4] sm:$0xf] %vm969, %v968
          %v971 = vld [vmem:[%s4] sm:$0xff]
          %v972 = vld [vmem:[%s4 + $0x8] sm:$0xff]
          %v973 = vld [vmem:[%s4 + $0x10] sm:$0xff]
          %v974 = vld [vmem:[%s4 + $0x18] sm:$0xff]
          %975 = vset.pattern.permute.xlu0 0
          %976 = vperm.xlu0 %975, %v971
          %v977 = vpop.permute.xlu0 %976
          %978 = vset.pattern.permute.xlu0 0
          %979 = vperm.xlu0 %978, %v972
          %v980 = vpop.permute.xlu0 %979
          %981 = vset.pattern.permute.xlu0 0
          %982 = vperm.xlu0 %981, %v973
          %v983 = vpop.permute.xlu0 %982
          %984 = vset.pattern.permute.xlu0 0
          %985 = vperm.xlu0 %984, %v974
          %v986 = vpop.permute.xlu0 %985
          %vm987 = vcmp.eq.s32.totalorder %v940, %v977
          %vm988 = vcmp.eq.s32.totalorder %v940, %v980
          %vm989 = vcmp.eq.s32.totalorder %v940, %v983
          %vm990 = vcmp.eq.s32.totalorder %v940, %v986
          %v991 = vsel %vm987, 1, 0
          %v992 = vsel %vm988, 1, 0
          %v993 = vsel %vm989, 1, 0
          %v994 = vsel %vm990, 1, 0
          %v995 = vcvt.s32.f32 %v991
          %v996 = vcvt.s32.f32 %v992
          %v997 = vcvt.s32.f32 %v993
          %v998 = vcvt.s32.f32 %v994
          %v999 = vpack.c.bf16 %v996, %v995
          %v1000 = vpack.c.bf16 %v998, %v997
          %1001 = vst [vmem:[#allocation5] sm:$0xff] %v999
          %1002 = vst [vmem:[#allocation5 + $0x8] sm:$0xff] %v1000
          %v1003 = vld [vmem:[%s0] sm:$0xff]
          %v1004 = vld [vmem:[%s0 + $0x8] sm:$0xff]
          %v1005 = vld [vmem:[%s0 + $0x10] sm:$0xff]
          %v1006 = vld [vmem:[%s0 + $0x18] sm:$0xff]
          %1007 = vset.pattern.permute.xlu0 0
          %1008 = vperm.xlu0 %1007, %v1003
          %v1009 = vpop.permute.xlu0 %1008
          %1010 = vset.pattern.permute.xlu0 0
          %1011 = vperm.xlu0 %1010, %v1004
          %v1012 = vpop.permute.xlu0 %1011
          %1013 = vset.pattern.permute.xlu0 0
          %1014 = vperm.xlu0 %1013, %v1005
          %v1015 = vpop.permute.xlu0 %1014
          %1016 = vset.pattern.permute.xlu0 0
          %1017 = vperm.xlu0 %1016, %v1006
          %v1018 = vpop.permute.xlu0 %1017
          %vm1019 = vcmp.eq.s32.totalorder %v940, %v1009
          %vm1020 = vcmp.eq.s32.totalorder %v940, %v1012
          %vm1021 = vcmp.eq.s32.totalorder %v940, %v1015
          %vm1022 = vcmp.eq.s32.totalorder %v940, %v1018
          %v1023 = vsel %vm1019, 1, 0
          %v1024 = vsel %vm1020, 1, 0
          %v1025 = vsel %vm1021, 1, 0
          %v1026 = vsel %vm1022, 1, 0
          %v1027 = vcvt.s32.f32 %v1023
          %v1028 = vcvt.s32.f32 %v1024
          %v1029 = vcvt.s32.f32 %v1025
          %v1030 = vcvt.s32.f32 %v1026
          %v1031 = vpack.c.bf16 %v1028, %v1027
          %v1032 = vpack.c.bf16 %v1030, %v1029
          %vm1033 = vcmask 130048
          %1034 = vst.msk [vmem:[#allocation6] sm:$0xff] %vm1033, %v1031
          %1035 = vst.msk [vmem:[#allocation6 + $0x8] sm:$0xff] %vm1033, %v1032
          %v1036 = vadd.s32 %v959, 8
          %v1037 = vld [vmem:[#allocation8] sm:$0x1]
          %v1038 = vlaneseq
          %v1039 = vshrl.u32 %v1038, 7
          %v1040 = vsub.s32 0, %v1039
          %v1041 = vrot.slane %v1037, %v1040
          %vm1042 = vcmp.eq.s32.totalorder %v959, %v1041
          %vm1043 = vcmp.eq.s32.totalorder %v1036, %v1041
          %v1044 = vsel %vm1042, 1, 0
          %v1045 = vsel %vm1043, 1, 0
          %v1046 = vcvt.s32.f32 %v1044
          %v1047 = vcvt.s32.f32 %v1045
          %v1048 = vpack.c.bf16 %v1047, %v1046
          %vm1049 = vcmask 261120
          %1050 = vst.msk [vmem:[#allocation7] sm:$0xff] %vm1049, %v1048
        $region132: #{tpu_custom_call.1} parent=87 // pred_fallthru
          _
        %v1051 = vld [vmem:[#allocation22] sm:$0xff]
        %v1052 = vld [vmem:[#allocation22 + $0x8] sm:$0xff]
        %v1053 = vld [vmem:[#allocation2] sm:$0xff]
        %v1054 = vld [vmem:[#allocation3] sm:$0xff]
        %v1055 = vpack.c.bf16 %v1053, %v1053
        %vm1056 = vcmask 64512
        %v1058 = vsel %vm1056, %v1054, 0
        %vm1060 = vcmask 1043456
        %v1062 = vsel %vm1060, %v1055, 0
        %1064 = vmatprep.subr.bf16.mxu0 0
        %1065 = vmatpush1.bf16.msra.mxu0 %v1062
        %1066 = vmatprep.subr.bf16.mxu0 0
        %1067 = vmatpush1.bf16.msra.mxu0 0
        %1068 = vmatprep.subr.bf16.mxu0 0
        %1069 = vmatpush1.bf16.msra.mxu0 0
        %1070 = vmatprep.subr.bf16.mxu0 0
        %1071 = vmatpush1.bf16.msra.mxu0 0
        %1072 = vmatprep.subr.bf16.mxu0 0
        %1073 = vmatpush1.bf16.msra.mxu0 0
        %1074 = vmatprep.subr.bf16.mxu0 0
        %1075 = vmatpush1.bf16.msra.mxu0 0
        %1076 = vmatprep.subr.bf16.mxu0 0
        %1077 = vmatpush1.bf16.msra.mxu0 0
        %1078 = vmatprep.subr.bf16.mxu0 0
        %1079 = vmatpush1.bf16.msra.mxu0 0
        %1080 = vmatprep.subr.bf16.mxu0 0
        %1081 = vmatpush1.bf16.msra.mxu0 0
        %1082 = vmatprep.subr.bf16.mxu0 0
        %1083 = vmatpush1.bf16.msra.mxu0 0
        %1084 = vmatprep.subr.bf16.mxu0 0
        %1085 = vmatpush1.bf16.msra.mxu0 0
        %1086 = vmatprep.subr.bf16.mxu0 0
        %1087 = vmatpush1.bf16.msra.mxu0 0
        %1088 = vmatprep.subr.bf16.mxu0 0
        %1089 = vmatpush1.bf16.msra.mxu0 0
        %1090 = vmatprep.subr.bf16.mxu0 0
        %1091 = vmatpush1.bf16.msra.mxu0 0
        %1092 = vmatprep.subr.bf16.mxu0 0
        %1093 = vmatpush1.bf16.msra.mxu0 0
        %1094 = vmatprep.subr.bf16.mxu0 0
        %1095 = vmatpush1.bf16.msra.mxu0 0
        %1096 = vmatprep.mubr.bf16.mxu0 0
        %1097 = vmatmul.mubr.bf16.gmra.mrb[0].mxu0 %v1058
        %v1098 = vpop.f32.mrb[0].mxu0
        %v1099 = vadd.f32 0.0, %v1098
        %v1100 = vpop.f32.mrb[0].mxu0
        %v1101 = vpop.f32.mrb[0].mxu0
        %v1102 = vadd.f32 0.0, %v1101
        %v1103 = vpop.f32.mrb[0].mxu0
        %1104 = vdwg.mxu0
        %v1105 = vadd.f32 %v1051, %v1099
        %v1106 = vadd.f32 %v1052, %v1102
        %v1107 = vpack.c.bf16 %v1106, %v1105
        %v1108 = vld [vmem:[%s762] sm:$0xf]
        %v1109 = vld [vmem:[%s762 + $0x4] sm:$0xf]
        %v1110 = vld [vmem:[%s762 + $0x8] sm:$0xf]
        %v1111 = vld [vmem:[%s762 + $0xc] sm:$0xf]
        %v1112 = vld [vmem:[%s762 + $0x10] sm:$0xf]
        %v1113 = vld [vmem:[%s762 + $0x14] sm:$0xf]
        %v1114 = vld [vmem:[%s762 + $0x18] sm:$0xf]
        %v1115 = vld [vmem:[%s762 + $0x1c] sm:$0xf]
        %v1116 = vld [vmem:[%s762 + $0x20] sm:$0xf]
        %v1117 = vld [vmem:[%s762 + $0x24] sm:$0xf]
        %v1118 = vld [vmem:[%s762 + $0x28] sm:$0xf]
        %v1119 = vld [vmem:[%s762 + $0x2c] sm:$0xf]
        %v1120 = vld [vmem:[%s762 + $0x30] sm:$0xf]
        %v1121 = vld [vmem:[%s762 + $0x34] sm:$0xf]
        %v1122 = vld [vmem:[%s762 + $0x38] sm:$0xf]
        %v1123 = vld [vmem:[%s762 + $0x3c] sm:$0xf]
        %v1124 = vld [vmem:[#allocation6] sm:$0xff]
        %v1125 = vld [vmem:[#allocation6 + $0x8] sm:$0xff]
        %v1126 = vld [vmem:[#allocation7] sm:$0xff]
        %v1127 = vld [vmem:[#allocation5] sm:$0xff]
        %v1128 = vld [vmem:[#allocation5 + $0x8] sm:$0xff]
        %v1145 = vunpack.c.l.b16 %v1108
        %v1146 = vunpack.c.l.b16 %v1109
        %v1147 = vunpack.c.l.b16 %v1110
        %v1148 = vunpack.c.l.b16 %v1111
        %v1149 = vunpack.c.l.b16 %v1112
        %v1150 = vunpack.c.l.b16 %v1113
        %v1151 = vunpack.c.l.b16 %v1114
        %v1152 = vunpack.c.l.b16 %v1115
        %v1153 = vunpack.c.l.b16 %v1116
        %v1154 = vunpack.c.l.b16 %v1117
        %v1155 = vunpack.c.l.b16 %v1118
        %v1156 = vunpack.c.l.b16 %v1119
        %v1157 = vunpack.c.l.b16 %v1120
        %v1158 = vunpack.c.l.b16 %v1121
        %v1159 = vunpack.c.l.b16 %v1122
        %v1160 = vunpack.c.l.b16 %v1123
        %v1161 = vpack.c.b16 %v1146, %v1145
        %v1162 = vpack.c.b16 %v1148, %v1147
        %v1163 = vpack.c.b16 %v1150, %v1149
        %v1164 = vpack.c.b16 %v1152, %v1151
        %v1165 = vpack.c.b16 %v1154, %v1153
        %v1166 = vpack.c.b16 %v1156, %v1155
        %v1167 = vpack.c.b16 %v1158, %v1157
        %v1168 = vpack.c.b16 %v1160, %v1159
        %1177 = vmatprep.subr.bf16.mxu0 0
        %1178 = vmatpush1.bf16.msra.mxu0 %v1161
        %1179 = vmatprep.subr.bf16.mxu0 0
        %1180 = vmatpush1.bf16.msra.mxu0 %v1162
        %1181 = vmatprep.subr.bf16.mxu0 0
        %1182 = vmatpush1.bf16.msra.mxu0 %v1163
        %1183 = vmatprep.subr.bf16.mxu0 0
        %1184 = vmatpush1.bf16.msra.mxu0 %v1164
        %1185 = vmatprep.subr.bf16.mxu0 0
        %1186 = vmatpush1.bf16.msra.mxu0 %v1165
        %1187 = vmatprep.subr.bf16.mxu0 0
        %1188 = vmatpush1.bf16.msra.mxu0 %v1166
        %1189 = vmatprep.subr.bf16.mxu0 0
        %1190 = vmatpush1.bf16.msra.mxu0 %v1167
        %1191 = vmatprep.subr.bf16.mxu0 0
        %1192 = vmatpush1.bf16.msra.mxu0 %v1168
        %1193 = vmatprep.subr.bf16.mxu0 0
        %1194 = vmatpush1.bf16.msra.mxu0 0
        %1195 = vmatprep.subr.bf16.mxu0 0
        %1196 = vmatpush1.bf16.msra.mxu0 0
        %1197 = vmatprep.subr.bf16.mxu0 0
        %1198 = vmatpush1.bf16.msra.mxu0 0
        %1199 = vmatprep.subr.bf16.mxu0 0
        %1200 = vmatpush1.bf16.msra.mxu0 0
        %1201 = vmatprep.subr.bf16.mxu0 0
        %1202 = vmatpush1.bf16.msra.mxu0 0
        %1203 = vmatprep.subr.bf16.mxu0 0
        %1204 = vmatpush1.bf16.msra.mxu0 0
        %1205 = vmatprep.subr.bf16.mxu0 0
        %1206 = vmatpush1.bf16.msra.mxu0 0
        %1207 = vmatprep.subr.bf16.mxu0 0
        %1208 = vmatpush1.bf16.msra.mxu0 0
        %1209 = vmatprep.mubr.bf16.mxu0 0
        %1210 = vmatmul.mubr.bf16.gmra.mrb[0].mxu0 %v1127
        %v1211 = vpop.f32.mrb[0].mxu0
        %v1212 = vadd.f32 0.0, %v1211
        %v1213 = vpop.f32.mrb[0].mxu0
        %v1214 = vpop.f32.mrb[0].mxu0
        %v1215 = vadd.f32 0.0, %v1214
        %v1216 = vpop.f32.mrb[0].mxu0
        %1217 = vmatprep.mubr.bf16.mxu0 0
        %1218 = vmatmul.mubr.bf16.gmra.mrb[0].mxu0 %v1128
        %v1219 = vpop.f32.mrb[0].mxu0
        %v1220 = vadd.f32 0.0, %v1219
        %v1221 = vpop.f32.mrb[0].mxu0
        %v1222 = vpop.f32.mrb[0].mxu0
        %v1223 = vadd.f32 0.0, %v1222
        %v1224 = vpop.f32.mrb[0].mxu0
        %1225 = vdwg.mxu0
        %vm1226 = vcmask 130048
        %v1228 = vsel %vm1226, %v1124, 0
        %v1231 = vsel %vm1226, %v1125, 0
        %1233 = vmatprep.subr.bf16.mxu0 0
        %1234 = vmatpush1.bf16.msra.mxu0 %v1107
        %1235 = vmatprep.subr.bf16.mxu0 0
        %1236 = vmatpush1.bf16.msra.mxu0 0
        %1237 = vmatprep.subr.bf16.mxu0 0
        %1238 = vmatpush1.bf16.msra.mxu0 0
        %1239 = vmatprep.subr.bf16.mxu0 0
        %1240 = vmatpush1.bf16.msra.mxu0 0
        %1241 = vmatprep.subr.bf16.mxu0 0
        %1242 = vmatpush1.bf16.msra.mxu0 0
        %1243 = vmatprep.subr.bf16.mxu0 0
        %1244 = vmatpush1.bf16.msra.mxu0 0
        %1245 = vmatprep.subr.bf16.mxu0 0
        %1246 = vmatpush1.bf16.msra.mxu0 0
        %1247 = vmatprep.subr.bf16.mxu0 0
        %1248 = vmatpush1.bf16.msra.mxu0 0
        %1249 = vmatprep.subr.bf16.mxu0 0
        %1250 = vmatpush1.bf16.msra.mxu0 0
        %1251 = vmatprep.subr.bf16.mxu0 0
        %1252 = vmatpush1.bf16.msra.mxu0 0
        %1253 = vmatprep.subr.bf16.mxu0 0
        %1254 = vmatpush1.bf16.msra.mxu0 0
        %1255 = vmatprep.subr.bf16.mxu0 0
        %1256 = vmatpush1.bf16.msra.mxu0 0
        %1257 = vmatprep.subr.bf16.mxu0 0
        %1258 = vmatpush1.bf16.msra.mxu0 0
        %1259 = vmatprep.subr.bf16.mxu0 0
        %1260 = vmatpush1.bf16.msra.mxu0 0
        %1261 = vmatprep.subr.bf16.mxu0 0
        %1262 = vmatpush1.bf16.msra.mxu0 0
        %1263 = vmatprep.subr.bf16.mxu0 0
        %1264 = vmatpush1.bf16.msra.mxu0 0
        %1265 = vmatprep.mubr.bf16.mxu0 0
        %1266 = vmatmul.mubr.bf16.gmra.mrb[0].mxu0 %v1228
        %v1267 = vpop.f32.mrb[0].mxu0
        %v1268 = vadd.f32 %v1212, %v1267
        %v1269 = vpop.f32.mrb[0].mxu0
        %v1270 = vpop.f32.mrb[0].mxu0
        %v1271 = vadd.f32 %v1215, %v1270
        %v1272 = vpop.f32.mrb[0].mxu0
        %1273 = vmatprep.mubr.bf16.mxu0 0
        %1274 = vmatmul.mubr.bf16.gmra.mrb[0].mxu0 %v1231
        %v1275 = vpop.f32.mrb[0].mxu0
        %v1276 = vadd.f32 %v1220, %v1275
        %v1277 = vpop.f32.mrb[0].mxu0
        %v1278 = vpop.f32.mrb[0].mxu0
        %v1279 = vadd.f32 %v1223, %v1278
        %v1280 = vpop.f32.mrb[0].mxu0
        %1281 = vdwg.mxu0
        %v1282 = vmax.f32 %v1268, 0.0
        %v1283 = vmax.f32 %v1271, 0.0
        %v1284 = vmax.f32 %v1276, 0.0
        %v1285 = vmax.f32 %v1279, 0.0
        %v1286 = vpack.c.bf16 %v1283, %v1282
        %v1287 = vpack.c.bf16 %v1285, %v1284
        %vm1288 = vcmask 261120
        %v1290 = vsel %vm1288, %v1126, 0
        %1292 = vmatprep.subr.bf16.mxu0 0
        %1293 = vmatpush1.bf16.msra.mxu0 %v1286
        %1294 = vmatprep.subr.bf16.mxu0 0
        %1295 = vmatpush1.bf16.msra.mxu0 %v1287
        %1296 = vmatprep.subr.bf16.mxu0 0
        %1297 = vmatpush1.bf16.msra.mxu0 0
        %1298 = vmatprep.subr.bf16.mxu0 0
        %1299 = vmatpush1.bf16.msra.mxu0 0
        %1300 = vmatprep.subr.bf16.mxu0 0
        %1301 = vmatpush1.bf16.msra.mxu0 0
        %1302 = vmatprep.subr.bf16.mxu0 0
        %1303 = vmatpush1.bf16.msra.mxu0 0
        %1304 = vmatprep.subr.bf16.mxu0 0
        %1305 = vmatpush1.bf16.msra.mxu0 0
        %1306 = vmatprep.subr.bf16.mxu0 0
        %1307 = vmatpush1.bf16.msra.mxu0 0
        %1308 = vmatprep.subr.bf16.mxu0 0
        %1309 = vmatpush1.bf16.msra.mxu0 0
        %1310 = vmatprep.subr.bf16.mxu0 0
        %1311 = vmatpush1.bf16.msra.mxu0 0
        %1312 = vmatprep.subr.bf16.mxu0 0
        %1313 = vmatpush1.bf16.msra.mxu0 0
        %1314 = vmatprep.subr.bf16.mxu0 0
        %1315 = vmatpush1.bf16.msra.mxu0 0
        %1316 = vmatprep.subr.bf16.mxu0 0
        %1317 = vmatpush1.bf16.msra.mxu0 0
        %1318 = vmatprep.subr.bf16.mxu0 0
        %1319 = vmatpush1.bf16.msra.mxu0 0
        %1320 = vmatprep.subr.bf16.mxu0 0
        %1321 = vmatpush1.bf16.msra.mxu0 0
        %1322 = vmatprep.subr.bf16.mxu0 0
        %1323 = vmatpush1.bf16.msra.mxu0 0
        %1324 = vmatprep.mubr.bf16.mxu0 0
        %1325 = vmatmul.mubr.bf16.gmra.mrb[0].mxu0 %v1290
        %v1326 = vpop.f32.mrb[0].mxu0
        %v1327 = vadd.f32 0.0, %v1326
        %v1328 = vpop.f32.mrb[0].mxu0
        %v1329 = vpop.f32.mrb[0].mxu0
        %v1330 = vadd.f32 0.0, %v1329
        %v1331 = vpop.f32.mrb[0].mxu0
        %1332 = vdwg.mxu0
        %v1333 = vld [vmem:[%s753] sm:$0x1]
        %v1335 = vlaneseq
        %v1336 = vshrl.u32 %v1335, 7
        %v1337 = vsub.s32 0, %v1336
        %v1338 = vrot.slane %v1333, %v1337
        %v1340 = vmul.f32 %v1338, %v1105
        %v1341 = vmul.f32 %v1338, %v1106
        %v1342 = vadd.f32 %v1340, %v1327
        %v1343 = vadd.f32 %v1341, %v1330
        %v1344 = vpack.c.bf16 %v1343, %v1342
        %v1345 = vld [vmem:[%s771] sm:$0xf]
        %v1346 = vld [vmem:[%s771 + $0x4] sm:$0xf]
        %v1347 = vld [vmem:[%s771 + $0x8] sm:$0xf]
        %v1348 = vld [vmem:[%s771 + $0xc] sm:$0xf]
        %v1349 = vld [vmem:[%s771 + $0x10] sm:$0xf]
        %v1350 = vld [vmem:[%s771 + $0x14] sm:$0xf]
        %v1351 = vld [vmem:[%s771 + $0x18] sm:$0xf]
        %v1352 = vld [vmem:[%s771 + $0x1c] sm:$0xf]
        %v1353 = vld [vmem:[%s771 + $0x20] sm:$0xf]
        %v1354 = vld [vmem:[%s771 + $0x24] sm:$0xf]
        %v1355 = vld [vmem:[%s771 + $0x28] sm:$0xf]
        %v1356 = vld [vmem:[%s771 + $0x2c] sm:$0xf]
        %v1357 = vld [vmem:[%s771 + $0x30] sm:$0xf]
        %v1358 = vld [vmem:[%s771 + $0x34] sm:$0xf]
        %v1359 = vld [vmem:[%s771 + $0x38] sm:$0xf]
        %v1360 = vld [vmem:[%s771 + $0x3c] sm:$0xf]
        %v1361 = vld [vmem:[%s779] sm:$0x1]
        %v1363 = vlaneseq
        %v1364 = vshrl.u32 %v1363, 7
        %v1365 = vsub.s32 0, %v1364
        %v1366 = vrot.slane %v1361, %v1365
        %v1384 = vunpack.c.l.b16 %v1345
        %v1385 = vunpack.c.l.b16 %v1346
        %v1386 = vunpack.c.l.b16 %v1347
        %v1387 = vunpack.c.l.b16 %v1348
        %v1388 = vunpack.c.l.b16 %v1349
        %v1389 = vunpack.c.l.b16 %v1350
        %v1390 = vunpack.c.l.b16 %v1351
        %v1391 = vunpack.c.l.b16 %v1352
        %v1392 = vunpack.c.l.b16 %v1353
        %v1393 = vunpack.c.l.b16 %v1354
        %v1394 = vunpack.c.l.b16 %v1355
        %v1395 = vunpack.c.l.b16 %v1356
        %v1396 = vunpack.c.l.b16 %v1357
        %v1397 = vunpack.c.l.b16 %v1358
        %v1398 = vunpack.c.l.b16 %v1359
        %v1399 = vunpack.c.l.b16 %v1360
        %v1400 = vpack.c.b16 %v1385, %v1384
        %v1401 = vpack.c.b16 %v1387, %v1386
        %v1402 = vpack.c.b16 %v1389, %v1388
        %v1403 = vpack.c.b16 %v1391, %v1390
        %v1404 = vpack.c.b16 %v1393, %v1392
        %v1405 = vpack.c.b16 %v1395, %v1394
        %v1406 = vpack.c.b16 %v1397, %v1396
        %v1407 = vpack.c.b16 %v1399, %v1398
        %1416 = vmatprep.subr.bf16.mxu0 0
        %1417 = vmatpush1.bf16.msra.mxu0 %v1400
        %1418 = vmatprep.subr.bf16.mxu0 0
        %1419 = vmatpush1.bf16.msra.mxu0 %v1401
        %1420 = vmatprep.subr.bf16.mxu0 0
        %1421 = vmatpush1.bf16.msra.mxu0 %v1402
        %1422 = vmatprep.subr.bf16.mxu0 0
        %1423 = vmatpush1.bf16.msra.mxu0 %v1403
        %1424 = vmatprep.subr.bf16.mxu0 0
        %1425 = vmatpush1.bf16.msra.mxu0 %v1404
        %1426 = vmatprep.subr.bf16.mxu0 0
        %1427 = vmatpush1.bf16.msra.mxu0 %v1405
        %1428 = vmatprep.subr.bf16.mxu0 0
        %1429 = vmatpush1.bf16.msra.mxu0 %v1406
        %1430 = vmatprep.subr.bf16.mxu0 0
        %1431 = vmatpush1.bf16.msra.mxu0 %v1407
        %1432 = vmatprep.subr.bf16.mxu0 0
        %1433 = vmatpush1.bf16.msra.mxu0 0
        %1434 = vmatprep.subr.bf16.mxu0 0
        %1435 = vmatpush1.bf16.msra.mxu0 0
        %1436 = vmatprep.subr.bf16.mxu0 0
        %1437 = vmatpush1.bf16.msra.mxu0 0
        %1438 = vmatprep.subr.bf16.mxu0 0
        %1439 = vmatpush1.bf16.msra.mxu0 0
        %1440 = vmatprep.subr.bf16.mxu0 0
        %1441 = vmatpush1.bf16.msra.mxu0 0
        %1442 = vmatprep.subr.bf16.mxu0 0
        %1443 = vmatpush1.bf16.msra.mxu0 0
        %1444 = vmatprep.subr.bf16.mxu0 0
        %1445 = vmatpush1.bf16.msra.mxu0 0
        %1446 = vmatprep.subr.bf16.mxu0 0
        %1447 = vmatpush1.bf16.msra.mxu0 0
        %1448 = vmatprep.mubr.bf16.mxu0 0
        %1449 = vmatmul.mubr.bf16.gmra.mrb[0].mxu0 %v1344
        %v1450 = vpop.f32.mrb[0].mxu0
        %v1451 = vadd.f32 %v1366, %v1450
        %v1452 = vpop.f32.mrb[0].mxu0
        %v1453 = vpop.f32.mrb[0].mxu0
        %v1454 = vadd.f32 %v1366, %v1453
        %v1455 = vpop.f32.mrb[0].mxu0
        %1456 = vdwg.mxu0
        %v1457 = vmax.f32 %v1451, 0.0
        %v1458 = vmax.f32 %v1454, 0.0
        %v1459 = vpack.c.bf16 %v1458, %v1457
        %v1460 = vld [vmem:[%s788] sm:$0xf]
        %v1461 = vld [vmem:[%s788 + $0x4] sm:$0xf]
        %v1462 = vld [vmem:[%s788 + $0x8] sm:$0xf]
        %v1463 = vld [vmem:[%s788 + $0xc] sm:$0xf]
        %v1464 = vld [vmem:[%s788 + $0x10] sm:$0xf]
        %v1465 = vld [vmem:[%s788 + $0x14] sm:$0xf]
        %v1466 = vld [vmem:[%s788 + $0x18] sm:$0xf]
        %v1467 = vld [vmem:[%s788 + $0x1c] sm:$0xf]
        %v1468 = vld [vmem:[%s788 + $0x20] sm:$0xf]
        %v1469 = vld [vmem:[%s788 + $0x24] sm:$0xf]
        %v1470 = vld [vmem:[%s788 + $0x28] sm:$0xf]
        %v1471 = vld [vmem:[%s788 + $0x2c] sm:$0xf]
        %v1472 = vld [vmem:[%s788 + $0x30] sm:$0xf]
        %v1473 = vld [vmem:[%s788 + $0x34] sm:$0xf]
        %v1474 = vld [vmem:[%s788 + $0x38] sm:$0xf]
        %v1475 = vld [vmem:[%s788 + $0x3c] sm:$0xf]
        %v1476 = vld [vmem:[%s796] sm:$0x1]
        %v1478 = vlaneseq
        %v1479 = vshrl.u32 %v1478, 7
        %v1480 = vsub.s32 0, %v1479
        %v1481 = vrot.slane %v1476, %v1480
        %v1499 = vunpack.c.l.b16 %v1460
        %v1500 = vunpack.c.l.b16 %v1461
        %v1501 = vunpack.c.l.b16 %v1462
        %v1502 = vunpack.c.l.b16 %v1463
        %v1503 = vunpack.c.l.b16 %v1464
        %v1504 = vunpack.c.l.b16 %v1465
        %v1505 = vunpack.c.l.b16 %v1466
        %v1506 = vunpack.c.l.b16 %v1467
        %v1507 = vunpack.c.l.b16 %v1468
        %v1508 = vunpack.c.l.b16 %v1469
        %v1509 = vunpack.c.l.b16 %v1470
        %v1510 = vunpack.c.l.b16 %v1471
        %v1511 = vunpack.c.l.b16 %v1472
        %v1512 = vunpack.c.l.b16 %v1473
        %v1513 = vunpack.c.l.b16 %v1474
        %v1514 = vunpack.c.l.b16 %v1475
        %v1515 = vpack.c.b16 %v1500, %v1499
        %v1516 = vpack.c.b16 %v1502, %v1501
        %v1517 = vpack.c.b16 %v1504, %v1503
        %v1518 = vpack.c.b16 %v1506, %v1505
        %v1519 = vpack.c.b16 %v1508, %v1507
        %v1520 = vpack.c.b16 %v1510, %v1509
        %v1521 = vpack.c.b16 %v1512, %v1511
        %v1522 = vpack.c.b16 %v1514, %v1513
        %1531 = vmatprep.subr.bf16.mxu0 0
        %1532 = vmatpush1.bf16.msra.mxu0 %v1515
        %1533 = vmatprep.subr.bf16.mxu0 0
        %1534 = vmatpush1.bf16.msra.mxu0 %v1516
        %1535 = vmatprep.subr.bf16.mxu0 0
        %1536 = vmatpush1.bf16.msra.mxu0 %v1517
        %1537 = vmatprep.subr.bf16.mxu0 0
        %1538 = vmatpush1.bf16.msra.mxu0 %v1518
        %1539 = vmatprep.subr.bf16.mxu0 0
        %1540 = vmatpush1.bf16.msra.mxu0 %v1519
        %1541 = vmatprep.subr.bf16.mxu0 0
        %1542 = vmatpush1.bf16.msra.mxu0 %v1520
        %1543 = vmatprep.subr.bf16.mxu0 0
        %1544 = vmatpush1.bf16.msra.mxu0 %v1521
        %1545 = vmatprep.subr.bf16.mxu0 0
        %1546 = vmatpush1.bf16.msra.mxu0 %v1522
        %1547 = vmatprep.subr.bf16.mxu0 0
        %1548 = vmatpush1.bf16.msra.mxu0 0
        %1549 = vmatprep.subr.bf16.mxu0 0
        %1550 = vmatpush1.bf16.msra.mxu0 0
        %1551 = vmatprep.subr.bf16.mxu0 0
        %1552 = vmatpush1.bf16.msra.mxu0 0
        %1553 = vmatprep.subr.bf16.mxu0 0
        %1554 = vmatpush1.bf16.msra.mxu0 0
        %1555 = vmatprep.subr.bf16.mxu0 0
        %1556 = vmatpush1.bf16.msra.mxu0 0
        %1557 = vmatprep.subr.bf16.mxu0 0
        %1558 = vmatpush1.bf16.msra.mxu0 0
        %1559 = vmatprep.subr.bf16.mxu0 0
        %1560 = vmatpush1.bf16.msra.mxu0 0
        %1561 = vmatprep.subr.bf16.mxu0 0
        %1562 = vmatpush1.bf16.msra.mxu0 0
        %1563 = vmatprep.mubr.bf16.mxu0 0
        %1564 = vmatmul.mubr.bf16.gmra.mrb[0].mxu0 %v1459
        %v1565 = vpop.f32.mrb[0].mxu0
        %v1566 = vadd.f32 %v1481, %v1565
        %v1567 = vpop.f32.mrb[0].mxu0
        %v1568 = vpop.f32.mrb[0].mxu0
        %v1569 = vadd.f32 %v1481, %v1568
        %v1570 = vpop.f32.mrb[0].mxu0
        %1571 = vdwg.mxu0
        %p1572 = scmp.eq.s32.totalorder %s35, 1
        %v1573 = vmax.f32 %v1566, 0.0
        %v1574 = vmax.f32 %v1569, 0.0
        %s1575 = scalar_select %p1572, 1, 0
        %v1576 = vstv %s1575
        %vm1577 = vcmp.eq.s32.totalorder %v1576, 1
        %v1578 = vsel %vm1577, %v1566, %v1573
        %v1579 = vsel %vm1577, %v1569, %v1574
        %v1580 = vadd.f32 %v1578, %v1105
        %v1581 = vadd.f32 %v1579, %v1106
        %1582 = vst [vmem:[#allocation22] sm:$0xff] %v1580
        %1583 = vst [vmem:[#allocation22 + $0x8] sm:$0xff] %v1581
        %p1584 = scmp.ne.s32.totalorder %s35, 1
        // Predicated region
        $region133: #{tpu_custom_call.1} parent=87 // pred_check
          %p1585 = pneg %p1584
        $region134: #{tpu_custom_call.1} parent=87 // pred_check_branch
          %1587 = sbr.rel (%p1585) target = $region136
        $region135: #{tpu_custom_call.1} parent=87 // pred_region
          %v1588 = vld [vmem:[#allocation4] sm:$0xf]
          %v1590 = vsel %vm1226, %v1588, 0
          %1592 = vmatprep.subr.bf16.mxu0 0
          %1593 = vmatpush1.bf16.msra.mxu0 %v1107
          %1594 = vmatprep.subr.bf16.mxu0 0
          %1595 = vmatpush1.bf16.msra.mxu0 0
          %1596 = vmatprep.subr.bf16.mxu0 0
          %1597 = vmatpush1.bf16.msra.mxu0 0
          %1598 = vmatprep.subr.bf16.mxu0 0
          %1599 = vmatpush1.bf16.msra.mxu0 0
          %1600 = vmatprep.subr.bf16.mxu0 0
          %1601 = vmatpush1.bf16.msra.mxu0 0
          %1602 = vmatprep.subr.bf16.mxu0 0
          %1603 = vmatpush1.bf16.msra.mxu0 0
          %1604 = vmatprep.subr.bf16.mxu0 0
          %1605 = vmatpush1.bf16.msra.mxu0 0
          %1606 = vmatprep.subr.bf16.mxu0 0
          %1607 = vmatpush1.bf16.msra.mxu0 0
          %1608 = vmatprep.subr.bf16.mxu0 0
          %1609 = vmatpush1.bf16.msra.mxu0 0
          %1610 = vmatprep.subr.bf16.mxu0 0
          %1611 = vmatpush1.bf16.msra.mxu0 0
          %1612 = vmatprep.subr.bf16.mxu0 0
          %1613 = vmatpush1.bf16.msra.mxu0 0
          %1614 = vmatprep.subr.bf16.mxu0 0
          %1615 = vmatpush1.bf16.msra.mxu0 0
          %1616 = vmatprep.subr.bf16.mxu0 0
          %1617 = vmatpush1.bf16.msra.mxu0 0
          %1618 = vmatprep.subr.bf16.mxu0 0
          %1619 = vmatpush1.bf16.msra.mxu0 0
          %1620 = vmatprep.subr.bf16.mxu0 0
          %1621 = vmatpush1.bf16.msra.mxu0 0
          %1622 = vmatprep.subr.bf16.mxu0 0
          %1623 = vmatpush1.bf16.msra.mxu0 0
          %1624 = vmatprep.mubr.bf16.mxu0 0
          %1625 = vmatmul.mubr.bf16.gmra.mrb[0].mxu0 %v1590
          %v1626 = vpop.f32.mrb[0].mxu0
          %v1627 = vadd.f32 %v1053, %v1626
          %v1628 = vpop.f32.mrb[0].mxu0
          %v1629 = vpop.f32.mrb[0].mxu0
          %v1630 = vpop.f32.mrb[0].mxu0
          %1631 = vdwg.mxu0
          %v1632 = vpack.c.bf16 %v1627, %v1627
          %v1633 = vld [vmem:[%s896] sm:$0xf]
          %v1634 = vld [vmem:[%s896 + $0x4] sm:$0xf]
          %v1635 = vld [vmem:[%s896 + $0x8] sm:$0xf]
          %v1636 = vld [vmem:[%s896 + $0xc] sm:$0xf]
          %v1637 = vld [vmem:[%s896 + $0x10] sm:$0xf]
          %v1638 = vld [vmem:[%s896 + $0x14] sm:$0xf]
          %v1639 = vld [vmem:[%s896 + $0x18] sm:$0xf]
          %v1640 = vld [vmem:[%s896 + $0x1c] sm:$0xf]
          %v1641 = vld [vmem:[%s896 + $0x20] sm:$0xf]
          %v1642 = vld [vmem:[%s896 + $0x24] sm:$0xf]
          %v1643 = vld [vmem:[%s896 + $0x28] sm:$0xf]
          %v1644 = vld [vmem:[%s896 + $0x2c] sm:$0xf]
          %v1645 = vld [vmem:[%s896 + $0x30] sm:$0xf]
          %v1646 = vld [vmem:[%s896 + $0x34] sm:$0xf]
          %v1647 = vld [vmem:[%s896 + $0x38] sm:$0xf]
          %v1648 = vld [vmem:[%s896 + $0x3c] sm:$0xf]
          %v1649 = vld [vmem:[%s903] sm:$0x1]
          %v1651 = vlaneseq
          %v1652 = vshrl.u32 %v1651, 7
          %v1653 = vsub.s32 0, %v1652
          %v1654 = vrot.slane %v1649, %v1653
          %v1672 = vunpack.c.l.b16 %v1633
          %v1673 = vunpack.c.l.b16 %v1634
          %v1674 = vunpack.c.l.b16 %v1635
          %v1675 = vunpack.c.l.b16 %v1636
          %v1676 = vunpack.c.l.b16 %v1637
          %v1677 = vunpack.c.l.b16 %v1638
          %v1678 = vunpack.c.l.b16 %v1639
          %v1679 = vunpack.c.l.b16 %v1640
          %v1680 = vunpack.c.l.b16 %v1641
          %v1681 = vunpack.c.l.b16 %v1642
          %v1682 = vunpack.c.l.b16 %v1643
          %v1683 = vunpack.c.l.b16 %v1644
          %v1684 = vunpack.c.l.b16 %v1645
          %v1685 = vunpack.c.l.b16 %v1646
          %v1686 = vunpack.c.l.b16 %v1647
          %v1687 = vunpack.c.l.b16 %v1648
          %v1688 = vpack.c.b16 %v1673, %v1672
          %v1689 = vpack.c.b16 %v1675, %v1674
          %v1690 = vpack.c.b16 %v1677, %v1676
          %v1691 = vpack.c.b16 %v1679, %v1678
          %v1692 = vpack.c.b16 %v1681, %v1680
          %v1693 = vpack.c.b16 %v1683, %v1682
          %v1694 = vpack.c.b16 %v1685, %v1684
          %v1695 = vpack.c.b16 %v1687, %v1686
          %1704 = vmatprep.subr.bf16.mxu0 0
          %1705 = vmatpush1.bf16.msra.mxu0 %v1688
          %1706 = vmatprep.subr.bf16.mxu0 0
          %1707 = vmatpush1.bf16.msra.mxu0 %v1689
          %1708 = vmatprep.subr.bf16.mxu0 0
          %1709 = vmatpush1.bf16.msra.mxu0 %v1690
          %1710 = vmatprep.subr.bf16.mxu0 0
          %1711 = vmatpush1.bf16.msra.mxu0 %v1691
          %1712 = vmatprep.subr.bf16.mxu0 0
          %1713 = vmatpush1.bf16.msra.mxu0 %v1692
          %1714 = vmatprep.subr.bf16.mxu0 0
          %1715 = vmatpush1.bf16.msra.mxu0 %v1693
          %1716 = vmatprep.subr.bf16.mxu0 0
          %1717 = vmatpush1.bf16.msra.mxu0 %v1694
          %1718 = vmatprep.subr.bf16.mxu0 0
          %1719 = vmatpush1.bf16.msra.mxu0 %v1695
          %1720 = vmatprep.subr.bf16.mxu0 0
          %1721 = vmatpush1.bf16.msra.mxu0 0
          %1722 = vmatprep.subr.bf16.mxu0 0
          %1723 = vmatpush1.bf16.msra.mxu0 0
          %1724 = vmatprep.subr.bf16.mxu0 0
          %1725 = vmatpush1.bf16.msra.mxu0 0
          %1726 = vmatprep.subr.bf16.mxu0 0
          %1727 = vmatpush1.bf16.msra.mxu0 0
          %1728 = vmatprep.subr.bf16.mxu0 0
          %1729 = vmatpush1.bf16.msra.mxu0 0
          %1730 = vmatprep.subr.bf16.mxu0 0
          %1731 = vmatpush1.bf16.msra.mxu0 0
          %1732 = vmatprep.subr.bf16.mxu0 0
          %1733 = vmatpush1.bf16.msra.mxu0 0
          %1734 = vmatprep.subr.bf16.mxu0 0
          %1735 = vmatpush1.bf16.msra.mxu0 0
          %1736 = vmatprep.mubr.bf16.mxu0 0
          %1737 = vmatmul.mubr.bf16.gmra.mrb[0].mxu0 %v1632
          %v1738 = vpop.f32.mrb[0].mxu0
          %v1739 = vadd.f32 %v1654, %v1738
          %v1740 = vpop.f32.mrb[0].mxu0
          %v1741 = vpop.f32.mrb[0].mxu0
          %v1742 = vpop.f32.mrb[0].mxu0
          %1743 = vdwg.mxu0
          %v1744 = vmax.f32 %v1739, 0.0
          %v1745 = vpack.c.bf16 %v1744, %v1744
          %v1746 = vld [vmem:[%s912] sm:$0xf]
          %v1747 = vld [vmem:[%s912 + $0x4] sm:$0xf]
          %v1748 = vld [vmem:[%s912 + $0x8] sm:$0xf]
          %v1749 = vld [vmem:[%s912 + $0xc] sm:$0xf]
          %v1750 = vld [vmem:[%s912 + $0x10] sm:$0xf]
          %v1751 = vld [vmem:[%s912 + $0x14] sm:$0xf]
          %v1752 = vld [vmem:[%s912 + $0x18] sm:$0xf]
          %v1753 = vld [vmem:[%s912 + $0x1c] sm:$0xf]
          %v1754 = vld [vmem:[%s912 + $0x20] sm:$0xf]
          %v1755 = vld [vmem:[%s912 + $0x24] sm:$0xf]
          %v1756 = vld [vmem:[%s912 + $0x28] sm:$0xf]
          %v1757 = vld [vmem:[%s912 + $0x2c] sm:$0xf]
          %v1758 = vld [vmem:[%s912 + $0x30] sm:$0xf]
          %v1759 = vld [vmem:[%s912 + $0x34] sm:$0xf]
          %v1760 = vld [vmem:[%s912 + $0x38] sm:$0xf]
          %v1761 = vld [vmem:[%s912 + $0x3c] sm:$0xf]
          %v1762 = vld [vmem:[%s919] sm:$0x1]
          %v1764 = vlaneseq
          %v1765 = vshrl.u32 %v1764, 7
          %v1766 = vsub.s32 0, %v1765
          %v1767 = vrot.slane %v1762, %v1766
          %v1785 = vunpack.c.l.b16 %v1746
          %v1786 = vunpack.c.l.b16 %v1747
          %v1787 = vunpack.c.l.b16 %v1748
          %v1788 = vunpack.c.l.b16 %v1749
          %v1789 = vunpack.c.l.b16 %v1750
          %v1790 = vunpack.c.l.b16 %v1751
          %v1791 = vunpack.c.l.b16 %v1752
          %v1792 = vunpack.c.l.b16 %v1753
          %v1793 = vunpack.c.l.b16 %v1754
          %v1794 = vunpack.c.l.b16 %v1755
          %v1795 = vunpack.c.l.b16 %v1756
          %v1796 = vunpack.c.l.b16 %v1757
          %v1797 = vunpack.c.l.b16 %v1758
          %v1798 = vunpack.c.l.b16 %v1759
          %v1799 = vunpack.c.l.b16 %v1760
          %v1800 = vunpack.c.l.b16 %v1761
          %v1801 = vpack.c.b16 %v1786, %v1785
          %v1802 = vpack.c.b16 %v1788, %v1787
          %v1803 = vpack.c.b16 %v1790, %v1789
          %v1804 = vpack.c.b16 %v1792, %v1791
          %v1805 = vpack.c.b16 %v1794, %v1793
          %v1806 = vpack.c.b16 %v1796, %v1795
          %v1807 = vpack.c.b16 %v1798, %v1797
          %v1808 = vpack.c.b16 %v1800, %v1799
          %1817 = vmatprep.subr.bf16.mxu0 0
          %1818 = vmatpush1.bf16.msra.mxu0 %v1801
          %1819 = vmatprep.subr.bf16.mxu0 0
          %1820 = vmatpush1.bf16.msra.mxu0 %v1802
          %1821 = vmatprep.subr.bf16.mxu0 0
          %1822 = vmatpush1.bf16.msra.mxu0 %v1803
          %1823 = vmatprep.subr.bf16.mxu0 0
          %1824 = vmatpush1.bf16.msra.mxu0 %v1804
          %1825 = vmatprep.subr.bf16.mxu0 0
          %1826 = vmatpush1.bf16.msra.mxu0 %v1805
          %1827 = vmatprep.subr.bf16.mxu0 0
          %1828 = vmatpush1.bf16.msra.mxu0 %v1806
          %1829 = vmatprep.subr.bf16.mxu0 0
          %1830 = vmatpush1.bf16.msra.mxu0 %v1807
          %1831 = vmatprep.subr.bf16.mxu0 0
          %1832 = vmatpush1.bf16.msra.mxu0 %v1808
          %1833 = vmatprep.subr.bf16.mxu0 0
          %1834 = vmatpush1.bf16.msra.mxu0 0
          %1835 = vmatprep.subr.bf16.mxu0 0
          %1836 = vmatpush1.bf16.msra.mxu0 0
          %1837 = vmatprep.subr.bf16.mxu0 0
          %1838 = vmatpush1.bf16.msra.mxu0 0
          %1839 = vmatprep.subr.bf16.mxu0 0
          %1840 = vmatpush1.bf16.msra.mxu0 0
          %1841 = vmatprep.subr.bf16.mxu0 0
          %1842 = vmatpush1.bf16.msra.mxu0 0
          %1843 = vmatprep.subr.bf16.mxu0 0
          %1844 = vmatpush1.bf16.msra.mxu0 0
          %1845 = vmatprep.subr.bf16.mxu0 0
          %1846 = vmatpush1.bf16.msra.mxu0 0
          %1847 = vmatprep.subr.bf16.mxu0 0
          %1848 = vmatpush1.bf16.msra.mxu0 0
          %1849 = vmatprep.mubr.bf16.mxu0 0
          %1850 = vmatmul.mubr.bf16.gmra.mrb[0].mxu0 %v1745
          %v1851 = vpop.f32.mrb[0].mxu0
          %v1852 = vadd.f32 %v1767, %v1851
          %v1853 = vpop.f32.mrb[0].mxu0
          %v1854 = vpop.f32.mrb[0].mxu0
          %v1855 = vpop.f32.mrb[0].mxu0
          %1856 = vdwg.mxu0
          %v1857 = vmax.f32 %v1852, 0.0
          %v1858 = vadd.f32 %v1053, %v1857
          %1859 = vst [vmem:[#allocation2] sm:$0xff] %v1858
        $region136: #{tpu_custom_call.1} parent=87 // pred_fallthru
          _
        // Predicated region
        $region137: #{tpu_custom_call.1} parent=87 // pred_check
          %p1860 = pneg %p1572
        $region138: #{tpu_custom_call.1} parent=87 // pred_check_branch
          %1862 = sbr.rel (%p1860) target = $region140
        $region139: #{tpu_custom_call.1} parent=87 // pred_region
          loop: start=0, step=1, limit=8
          $region141: #{tpu_custom_call.1} parent=139 // loop_pre_header
            _
          $region142: #{tpu_custom_call.1} parent=139 // loop_header
            %s1864 = sphi 0, %s1868
            %p1865 = scmp.ge.s32.totalorder %s1864, 8
            %v1869 = vphi -3e+38, %v1899
          $region143: #{tpu_custom_call.1} parent=139 // loop_header_branch
            %1867 = sbr.rel (%p1865) target = $region147
          $region144: #{tpu_custom_call.1} parent=139 // loop_body
            %v1870 = vld [vmem:[%s2] sm:$0xff]
            %v1871 = vld [vmem:[%s2 + $0x8] sm:$0xff]
            %v1872 = vstv %s1864
            %vm1873 = vcmp.eq.s32.totalorder %v1870, %v1872
            %vm1874 = vcmp.eq.s32.totalorder %v1871, %v1872
            %v1875 = vsel %vm1873, 1, 0
            %v1876 = vsel %vm1874, 1, 0
            %1877 = vset.pattern.permute.xlu0 0
            %1878 = vperm.xlu0 %1877, %v1875
            %v1879 = vpop.permute.xlu0 %1878
            %1880 = vset.pattern.permute.xlu0 0
            %1881 = vperm.xlu0 %1880, %v1876
            %v1882 = vpop.permute.xlu0 %1881
            %vm1883 = vcmp.eq.s32.totalorder %v1879, 1
            %vm1884 = vcmp.eq.s32.totalorder %v1882, 1
            %v1885 = vsel %vm1883, %v1580, -3e+38
            %v1886 = vsel %vm1884, %v1581, -3e+38
            %v1887 = vmax.f32 %v1885, %v1886
            %v1888 = vrot.slane %v1887, 4
            %v1889 = vmax.f32 %v1887, %v1888
            %v1890 = vrot.slane %v1889, 2
            %v1891 = vmax.f32 %v1889, %v1890
            %v1892 = vrot.slane %v1891, 1
            %v1893 = vmax.f32 %v1891, %v1892
            %v1894 = vlaneseq
            %v1895 = vshrl.u32 %v1894, 7
            %vm1896 = vcmp.eq.s32.totalorder %v1895, %v1872
            %v1897 = vsel %vm1896, 1, 0
            %vm1898 = vcmp.eq.s32.totalorder %v1897, 1
            %v1899 = vsel %vm1898, %v1893, %v1869
          $region145: #{tpu_custom_call.1} parent=139 // loop_footer
            %s1868 = sadd.s32 1, %s1864
          $region146: #{tpu_custom_call.1} parent=139 // loop_footer_branch
            %1863 = sbr.rel target = $region142
          $region147: #{tpu_custom_call.1} parent=139 // loop_exit
            _
          %1900 = vst [vmem:[#allocation23] sm:$0xff] %v1869
        $region140: #{tpu_custom_call.1} parent=87 // pred_fallthru
          _
        // Predicated region
        $region148: #{tpu_custom_call.1} parent=87 // pred_check
          %p1901 = pneg %p471
        $region149: #{tpu_custom_call.1} parent=87 // pred_check_branch
          %1903 = sbr.rel (%p1901) target = $region151
        $region150: #{tpu_custom_call.1} parent=87 // pred_region
          %s1905 = ssub.s32 256, 256
          %1906 = vsyncadd [#allocation10], %s1905
          %s1907 = sshll.u32 [#allocation22], 4
          %s1908 = int_to_ptr.vmem [resolvable:$true] %s1907
          %1913 = dma.vmem_to_hbm [thread:$0]  %s1908, 256, %s17, [#allocation10], 128, 128, 8
        $region151: #{tpu_custom_call.1} parent=87 // pred_fallthru
          _
        // Predicated region
        $region152: #{tpu_custom_call.1} parent=87 // pred_check
          %p1914 = pneg %p492
        $region153: #{tpu_custom_call.1} parent=87 // pred_check_branch
          %1916 = sbr.rel (%p1914) target = $region155
        $region154: #{tpu_custom_call.1} parent=87 // pred_region
          %s1918 = ssub.s32 128, 128
          %1919 = vsyncadd [#allocation24], %s1918
          %s1921 = sshll.u32 [#allocation23], 4
          %s1922 = int_to_ptr.vmem [resolvable:$true] %s1921
          %1924 = dma.vmem_to_hbm [thread:$0]  %s1922, 128, %s18, [#allocation24]
        $region155: #{tpu_custom_call.1} parent=87 // pred_fallthru
          _
        // Predicated region
        $region156: #{tpu_custom_call.1} parent=87 // pred_check
          %p1925 = pneg %p471
        $region157: #{tpu_custom_call.1} parent=87 // pred_check_branch
          %1927 = sbr.rel (%p1925) target = $region159
        $region158: #{tpu_custom_call.1} parent=87 // pred_region
          %1928 = dma.done [#allocation10], 256
        $region159: #{tpu_custom_call.1} parent=87 // pred_fallthru
          _
        // Predicated region
        $region160: #{tpu_custom_call.1} parent=87 // pred_check
          %p1929 = pneg %p492
        $region161: #{tpu_custom_call.1} parent=87 // pred_check_branch
          %1931 = sbr.rel (%p1929) target = $region163
        $region162: #{tpu_custom_call.1} parent=87 // pred_region
          %1932 = dma.done [#allocation24], 128
        $region163: #{tpu_custom_call.1} parent=87 // pred_fallthru
          _
      $region88: #{tpu_custom_call.1} parent=5 // pred_fallthru
        _
      %p1933 = scmp.le.s32.totalorder 2, %s30
      // Predicated region
      $region164: #{tpu_custom_call.1} parent=5 // pred_check
        %p1934 = pneg %p1933
      $region165: #{tpu_custom_call.1} parent=5 // pred_check_branch
        %1936 = sbr.rel (%p1934) target = $region167
      $region166: #{tpu_custom_call.1} parent=5 // pred_region
        %s1937 = ssub.s32 %s30, 2
      $region167: #{tpu_custom_call.1} parent=5 // pred_fallthru
        _
    $region6: #{tpu_custom_call.1} parent=1 // loop_footer
      %s34 = sadd.s32 1, %s30
    $region7: #{tpu_custom_call.1} parent=1 // loop_footer_branch
      %29 = sbr.rel target = $region3
    $region8: #{tpu_custom_call.1} parent=1 // loop_exit
      _
    %1938 = vsyncpa [#allocation9], 1
    %s1939 = scalar_lea.sflag [#allocation9], 1
    %1940 = vsyncpa %s1939, 1
    %1941 = vsyncpa [#allocation12], 1
    %1942 = vsyncpa [#allocation15], 1
    %1943 = vsyncpa [#allocation10], 1
    %s1944 = scalar_lea.sflag [#allocation10], 1
    %1945 = vsyncpa %s1944, 1
    %1946 = vsyncpa [#allocation24], 1

</llo_original>
